<compile_context>
chip_gen: v6e
topology: v6e:2x2x1
jax: 0.10.0
libtpu: 0.0.40
codegen_flags: <defaults>
</compile_context>

<pallas_src>
import math
import jax
import jax.numpy as jnp
from jax.experimental import pallas as pl
from jax.experimental.pallas import tpu as pltpu

# ---------------- configuration (small synthetic shapes) ----------------
B = 4            # batch
C_IN = 3         # image channels
H = W = 16       # spatial
C_FEAT = 64      # "final_in_features" produced by the backbone stub
FC_DIM = 32      # Config.FC_DIM analogue
N_CLASSES = 16   # Config.CLASSES analogue

S = B * H * W    # flattened batch*spatial (lane axis of the conv stage) = 1024
C_IN_PAD = 8     # zero-pad conv contraction K: 3 -> 8 (sublane-aligned, MXU-friendly)
B_PAD = 128      # batch padded to a full lane width for dense vregs / dense stores
# NOTE(perf): everything after pooling runs on (., B_PAD=128) tiles regardless of B, so
# batching up to 128 images per pallas_call costs ~the same tail/launch overhead; at B=4
# 97% of the fc/ArcFace/CE lane work is padding.

SCALE = 30.0
MARGIN = 0.5
COS_M = math.cos(MARGIN)
SIN_M = math.sin(MARGIN)
TH = math.cos(math.pi - MARGIN)
MM = math.sin(math.pi - MARGIN) * MARGIN
BN_EPS = 1e-5
NORM_EPS = 1e-12  # torch F.normalize eps

# TODO(synk): the real timm eca_nfnet_l0 backbone is a pretrained deep CNN with no clean
# single-kernel Pallas equivalent; it is stood in for here by a 1x1 conv + ReLU feature
# extractor with deterministic weights.
# TODO(synk): at production sizes (final_in~2304, FC_DIM~512, CLASSES~11014) the ArcFace
# matmul must be class-tiled with a grid: class axis marked "parallel" in
# dimension_semantics (2x on v7x's two TCs), class tiles <=2048 rows so bf16 W_arc tiles
# (~2 MB) double-buffer inside v7x's 64 MiB VMEM (raise vmem_limit_bytes explicitly and
# use pipeline_mode=pl.Buffered(2-3) on the W_arc spec), and low-precision weights
# (int8 on v5e/v6e, fp8 on v7x) since that matmul is HBM-bandwidth bound everywhere.


# --------- wrapper-side constant: block-diagonal pooling matrix (bf16, 256 KiB) --------
def _make_pool_matrix():
    # P[s, b] = 1/(H*W) if spatial position s belongs to batch element b, else 0.
    row_blk = jax.lax.broadcasted_iota(jnp.int32, (S, B_PAD), 0) // (H * W)
    col = jax.lax.broadcasted_iota(jnp.int32, (S, B_PAD), 1)
    p = (row_blk == col).astype(jnp.float32) * (1.0 / float(H * W))
    return p.astype(jnp.bfloat16)            # 1/256 is exact in bf16


POOL = _make_pool_matrix()                    # built once at import; constant under jit


# ---------------- fused kernel: backbone-stub + pool + fc(+bn) + ArcFace + CE ----------
def shopee_kernel(x_ref, wb_ref, bb_ref, pool_ref, wfc_ref, bfc_ref, warc_ref, label_ref,
                  logits_ref, loss_ref):
    # x_ref    : (C_IN_PAD, S) f32   channels on sublanes, batch-major spatial on lanes
    # wb_ref   : (C_FEAT, C_IN_PAD)  1x1 conv weight (backbone stub), zero-padded K
    # bb_ref   : (C_FEAT, 1)         conv bias (broadcast along lanes)
    # pool_ref : (S, B_PAD) bf16     precomputed block-diagonal pooling matrix
    # wfc_ref  : (FC_DIM, C_FEAT) bf16  fc weight with eval-BN scale folded in
    # bfc_ref  : (FC_DIM, 1) f32        fc bias with eval-BN shift folded in
    # warc_ref : (N_CLASSES, FC_DIM) bf16  ArcMargin weight, pre-normalized per row
    # label_ref: (1, B_PAD) int32    labels, padded columns set to -1

    # 1x1 conv (pointwise) + ReLU  -> (C_FEAT, S), all lanes dense
    y = jnp.dot(wb_ref[...], x_ref[...], preferred_element_type=jnp.float32) + bb_ref[...]
    y = jnp.maximum(y, 0.0)

    # AdaptiveAvgPool2d(1): MXU contraction against the precomputed pooling matrix.
    pooled = jnp.dot(y.astype(jnp.bfloat16), pool_ref[...],
                     preferred_element_type=jnp.float32)              # (C_FEAT, B_PAD)

    # Dropout(p=0.1): identity in eval mode.

    # fc + eval BatchNorm1d (folded into wfc'/bfc' in the wrapper)  -> (FC_DIM, B_PAD)
    feat = jnp.dot(wfc_ref[...], pooled.astype(jnp.bfloat16),
                   preferred_element_type=jnp.float32) + bfc_ref[...]

    # ---- ArcMarginProduct ----
    # F.normalize(features, dim=1): rsqrt (EUP) + multiply instead of sqrt + divide.
    sumsq = jnp.sum(feat * feat, axis=0, keepdims=True)               # (1, B_PAD)
    f_n = feat * jax.lax.rsqrt(jnp.maximum(sumsq, NORM_EPS * NORM_EPS))

    # warc_ref already normalized per class row (constant in eval, hoisted to wrapper)
    cosine = jnp.dot(warc_ref[...], f_n.astype(jnp.bfloat16),
                     preferred_element_type=jnp.float32)              # (N_CLASSES, B_PAD)
    # clamp to avoid NaN when |cosine| exceeds 1 by rounding
    sine = jnp.sqrt(jnp.clip(1.0 - cosine * cosine, 0.0, 1.0))
    phi = cosine * COS_M - sine * SIN_M
    phi = jnp.where(cosine > TH, phi, cosine - MM)                    # easy_margin=False

    label = label_ref[...]                                            # (1, B_PAD) int32
    cls = jax.lax.broadcasted_iota(jnp.int32, (N_CLASSES, B_PAD), 0)
    one_hot = (cls == label).astype(jnp.float32)                      # padded cols -> 0

    out = (one_hot * phi + (1.0 - one_hot) * cosine) * SCALE          # (N_CLASSES, B_PAD)
    logits_ref[...] = out                                             # dense 128-lane store

    # nn.CrossEntropyLoss (mean reduction over the B real examples)
    mx = jnp.max(out, axis=0, keepdims=True)
    lse = jnp.log(jnp.sum(jnp.exp(out - mx), axis=0, keepdims=True)) + mx   # (1, B_PAD)
    target = jnp.sum(one_hot * out, axis=0, keepdims=True)                  # (1, B_PAD)
    bmask = (jax.lax.broadcasted_iota(jnp.int32, (1, B_PAD), 1) < B).astype(jnp.float32)
    loss_ref[0, 0] = jnp.sum((lse - target) * bmask) * (1.0 / B)            # scalar -> SMEM


# ---------------- wrapper ----------------
def shopee_forward(image_nchw, label, params):
    Bn, C, Hh, Ww = image_nchw.shape
    # NCHW -> (C, B*H*W): channels on sublanes, batch-major spatial on lanes; pad K to 8.
    x = jnp.transpose(image_nchw, (1, 0, 2, 3)).reshape(C, Bn * Hh * Ww)
    x = jnp.pad(x, ((0, C_IN_PAD - C), (0, 0)))

    # labels as a lane-dense (1, B_PAD) int32 row; padded columns get -1 (never matches).
    lbl = jnp.full((1, B_PAD), -1, jnp.int32).at[0, :Bn].set(label.astype(jnp.int32))

    # Fold eval-mode BatchNorm1d into fc:  wfc' = s * wfc,  bfc' = s*(bfc - rmean) + beta,
    # with s = gamma * rsqrt(rvar + eps).  Constant algebra, hoisted out of the kernel.
    bn = params["bn"]
    gamma, beta, rmean, rvar = bn[:, 0], bn[:, 1], bn[:, 2], bn[:, 3]
    s = gamma * jax.lax.rsqrt(rvar + BN_EPS)                          # (FC_DIM,)
    wfc_fold = (params["wfc"] * s[:, None]).astype(jnp.bfloat16)      # (FC_DIM, C_FEAT)
    bfc_fold = (s * (params["bfc"][:, 0] - rmean) + beta)[:, None]    # (FC_DIM, 1) f32

    # Pre-normalize the ArcFace weight (constant in eval mode).
    w = params["w_arc"]
    w_norm = jnp.sqrt(jnp.sum(w * w, axis=1, keepdims=True))
    w_n = (w / jnp.maximum(w_norm, NORM_EPS)).astype(jnp.bfloat16)    # (N_CLASSES, FC_DIM)

    vmem = pl.BlockSpec(memory_space=pltpu.MemorySpace.VMEM)
    smem = pl.BlockSpec(memory_space=pltpu.MemorySpace.SMEM)

    logits_cb, loss = pl.pallas_call(
        shopee_kernel,
        out_shape=(
            jax.ShapeDtypeStruct((N_CLASSES, B_PAD), jnp.float32),
            jax.ShapeDtypeStruct((1, 1), jnp.float32),
        ),
        in_specs=[vmem] * 8,
        out_specs=(vmem, smem),
    )(x, params["wb"], params["bb"], POOL, wfc_fold, bfc_fold, w_n, lbl)

    # (n_classes, B_pad) -> (B, n_classes): wrapper-side layout plumbing only.
    logits = logits_cb[:, :Bn].T
    return logits, loss[0, 0]


def init_params(key):
    k1, k2, k3 = jax.random.split(key, 3)
    # backbone stub 1x1 conv, zero-padded along the (padded) input-channel axis
    wb = jax.random.normal(k1, (C_FEAT, C_IN), jnp.float32) * 0.1
    wb = jnp.pad(wb, ((0, 0), (0, C_IN_PAD - C_IN)))
    bb = jnp.zeros((C_FEAT, 1), jnp.float32)
    # fc: xavier_normal_, kept in PyTorch (out, in) layout (used untransposed in-kernel)
    std_fc = math.sqrt(2.0 / (C_FEAT + FC_DIM))
    wfc = jax.random.normal(k2, (FC_DIM, C_FEAT), jnp.float32) * std_fc
    bfc = jnp.zeros((FC_DIM, 1), jnp.float32)
    # bn columns: gamma=1, beta=0, running_mean=0, running_var=1
    bn = jnp.stack([
        jnp.ones((FC_DIM,), jnp.float32),
        jnp.zeros((FC_DIM,), jnp.float32),
        jnp.zeros((FC_DIM,), jnp.float32),
        jnp.ones((FC_DIM,), jnp.float32),
    ], axis=1)                                     # (FC_DIM, 4)
    # ArcMarginProduct weight: xavier_uniform_, PyTorch (out, in) layout
    lim = math.sqrt(6.0 / (FC_DIM + N_CLASSES))
    w_arc = jax.random.uniform(k3, (N_CLASSES, FC_DIM), jnp.float32, -lim, lim)
    return dict(wb=wb, bb=bb, wfc=wfc, bfc=bfc, bn=bn, w_arc=w_arc)


if __name__ == "__main__":
    key = jax.random.PRNGKey(0)
    kx, kl, kp = jax.random.split(key, 3)
    image = jax.random.normal(kx, (B, C_IN, H, W), jnp.float32)        # NCHW like PyTorch
    label = jax.random.randint(kl, (B,), 0, N_CLASSES, jnp.int32)
    params = init_params(kp)

    logits, loss = jax.jit(shopee_forward)(image, label, params)
    jax.block_until_ready((logits, loss))

    assert logits.shape == (B, N_CLASSES)
    assert loss.shape == ()
    assert bool(jnp.isfinite(loss))
    assert bool(jnp.all(jnp.isfinite(logits)))
    print("KERNEL_OK")
</pallas_src>

<mosaic_0001>
module attributes {stable_mosaic.version = 11 : i64} {
  func.func @shopee_kernel(%arg0: memref<8x1024xf32, #tpu.memory_space<vmem>>, %arg1: memref<64x8xf32, #tpu.memory_space<vmem>>, %arg2: memref<64x1xf32, #tpu.memory_space<vmem>>, %arg3: memref<1024x128xbf16, #tpu.memory_space<vmem>>, %arg4: memref<32x64xbf16, #tpu.memory_space<vmem>>, %arg5: memref<32x1xf32, #tpu.memory_space<vmem>>, %arg6: memref<16x32xbf16, #tpu.memory_space<vmem>>, %arg7: memref<1x128xi32, #tpu.memory_space<vmem>>, %arg8: memref<16x128xf32, #tpu.memory_space<vmem>>, %arg9: memref<1x1xf32, #tpu.memory_space<smem>>) attributes {dimension_semantics = [], scalar_prefetch = 0 : i64, scratch_operands = 0 : i64, tpu.core_type = #tpu.core_type<tc>} {
    %c0 = arith.constant 0 : index
    %c0_0 = arith.constant 0 : index
    %0 = vector.load %arg1[%c0, %c0_0] : memref<64x8xf32, #tpu.memory_space<vmem>>, vector<64x8xf32>
    %c0_1 = arith.constant 0 : index
    %c0_2 = arith.constant 0 : index
    %1 = vector.load %arg0[%c0_1, %c0_2] : memref<8x1024xf32, #tpu.memory_space<vmem>>, vector<8x1024xf32>
    %cst = arith.constant dense<0.000000e+00> : vector<64x1024xf32>
    %2 = tpu.matmul %0, %1, %cst {dimension_numbers = #tpu.dot_dimension_numbers<[1], [0], [0], [1], [0, 0, 1, 1], [], []>} : vector<64x8xf32>, vector<8x1024xf32>, vector<64x1024xf32> -> vector<64x1024xf32>
    %c0_3 = arith.constant 0 : index
    %c0_4 = arith.constant 0 : index
    %3 = vector.load %arg2[%c0_3, %c0_4] : memref<64x1xf32, #tpu.memory_space<vmem>>, vector<64x1xf32>
    %4 = vector.broadcast %3 : vector<64x1xf32> to vector<64x1024xf32>
    %5 = arith.addf %2, %4 : vector<64x1024xf32>
    %cst_5 = arith.constant 0.000000e+00 : f32
    %6 = vector.broadcast %cst_5 : f32 to vector<64x1024xf32>
    %7 = arith.maximumf %5, %6 : vector<64x1024xf32>
    %8 = arith.truncf %7 : vector<64x1024xf32> to vector<64x1024xbf16>
    %c0_6 = arith.constant 0 : index
    %c0_7 = arith.constant 0 : index
    %9 = vector.load %arg3[%c0_6, %c0_7] : memref<1024x128xbf16, #tpu.memory_space<vmem>>, vector<1024x128xbf16>
    %cst_8 = arith.constant dense<0.000000e+00> : vector<64x128xf32>
    %10 = tpu.matmul %8, %9, %cst_8 {dimension_numbers = #tpu.dot_dimension_numbers<[1], [0], [0], [1], [0, 0, 1, 1], [], []>} : vector<64x1024xbf16>, vector<1024x128xbf16>, vector<64x128xf32> -> vector<64x128xf32>
    %c0_9 = arith.constant 0 : index
    %c0_10 = arith.constant 0 : index
    %11 = vector.load %arg4[%c0_9, %c0_10] : memref<32x64xbf16, #tpu.memory_space<vmem>>, vector<32x64xbf16>
    %12 = arith.truncf %10 : vector<64x128xf32> to vector<64x128xbf16>
    %cst_11 = arith.constant dense<0.000000e+00> : vector<32x128xf32>
    %13 = tpu.matmul %11, %12, %cst_11 {dimension_numbers = #tpu.dot_dimension_numbers<[1], [0], [0], [1], [0, 0, 1, 1], [], []>} : vector<32x64xbf16>, vector<64x128xbf16>, vector<32x128xf32> -> vector<32x128xf32>
    %c0_12 = arith.constant 0 : index
    %c0_13 = arith.constant 0 : index
    %14 = vector.load %arg5[%c0_12, %c0_13] : memref<32x1xf32, #tpu.memory_space<vmem>>, vector<32x1xf32>
    %15 = vector.broadcast %14 : vector<32x1xf32> to vector<32x128xf32>
    %16 = arith.addf %13, %15 : vector<32x128xf32>
    %17 = arith.mulf %16, %16 : vector<32x128xf32>
    %cst_14 = arith.constant dense<0.000000e+00> : vector<128xf32>
    %18 = vector.multi_reduction <add>, %17, %cst_14 [0] : vector<32x128xf32> to vector<128xf32>
    %19 = vector.shape_cast %18 : vector<128xf32> to vector<1x128xf32>
    %cst_15 = arith.constant 1.000000e-24 : f32
    %20 = vector.broadcast %cst_15 : f32 to vector<1x128xf32>
    %21 = arith.maximumf %19, %20 : vector<1x128xf32>
    %22 = math.rsqrt %21 : vector<1x128xf32>
    %23 = vector.broadcast %22 : vector<1x128xf32> to vector<32x128xf32>
    %24 = arith.mulf %16, %23 : vector<32x128xf32>
    %c0_16 = arith.constant 0 : index
    %c0_17 = arith.constant 0 : index
    %25 = vector.load %arg6[%c0_16, %c0_17] : memref<16x32xbf16, #tpu.memory_space<vmem>>, vector<16x32xbf16>
    %26 = arith.truncf %24 : vector<32x128xf32> to vector<32x128xbf16>
    %cst_18 = arith.constant dense<0.000000e+00> : vector<16x128xf32>
    %27 = tpu.matmul %25, %26, %cst_18 {dimension_numbers = #tpu.dot_dimension_numbers<[1], [0], [0], [1], [0, 0, 1, 1], [], []>} : vector<16x32xbf16>, vector<32x128xbf16>, vector<16x128xf32> -> vector<16x128xf32>
    %28 = arith.mulf %27, %27 : vector<16x128xf32>
    %cst_19 = arith.constant 1.000000e+00 : f32
    %29 = vector.broadcast %cst_19 : f32 to vector<16x128xf32>
    %30 = arith.subf %29, %28 : vector<16x128xf32>
    %cst_20 = arith.constant 0.000000e+00 : f32
    %cst_21 = arith.constant 1.000000e+00 : f32
    %31 = vector.broadcast %cst_20 : f32 to vector<16x128xf32>
    %32 = arith.maximumf %31, %30 : vector<16x128xf32>
    %33 = vector.broadcast %cst_21 : f32 to vector<16x128xf32>
    %34 = arith.minimumf %33, %32 : vector<16x128xf32>
    %35 = math.sqrt %34 : vector<16x128xf32>
    %cst_22 = arith.constant 0.87758255 : f32
    %36 = vector.broadcast %cst_22 : f32 to vector<16x128xf32>
    %37 = arith.mulf %27, %36 : vector<16x128xf32>
    %cst_23 = arith.constant 0.47942555 : f32
    %38 = vector.broadcast %cst_23 : f32 to vector<16x128xf32>
    %39 = arith.mulf %35, %38 : vector<16x128xf32>
    %40 = arith.subf %37, %39 : vector<16x128xf32>
    %cst_24 = arith.constant -0.87758255 : f32
    %41 = vector.broadcast %cst_24 : f32 to vector<16x128xf32>
    %42 = arith.cmpf ogt, %27, %41 : vector<16x128xf32>
    %cst_25 = arith.constant 0.239712775 : f32
    %43 = vector.broadcast %cst_25 : f32 to vector<16x128xf32>
    %44 = arith.subf %27, %43 : vector<16x128xf32>
    %45 = arith.select %42, %40, %44 : vector<16x128xi1>, vector<16x128xf32>
    %c0_26 = arith.constant 0 : index
    %c0_27 = arith.constant 0 : index
    %46 = vector.load %arg7[%c0_26, %c0_27] : memref<1x128xi32, #tpu.memory_space<vmem>>, vector<1x128xi32>
    %47 = tpu.iota {dimensions = array<i32: 0>} : vector<16x128xi32>
    %48 = vector.broadcast %46 : vector<1x128xi32> to vector<16x128xi32>
    %49 = arith.cmpi eq, %47, %48 : vector<16x128xi32>
    %50 = arith.extui %49 : vector<16x128xi1> to vector<16x128xi32>
    %51 = arith.sitofp %50 : vector<16x128xi32> to vector<16x128xf32>
    %52 = arith.mulf %51, %45 : vector<16x128xf32>
    %cst_28 = arith.constant 1.000000e+00 : f32
    %53 = vector.broadcast %cst_28 : f32 to vector<16x128xf32>
    %54 = arith.subf %53, %51 : vector<16x128xf32>
    %55 = arith.mulf %54, %27 : vector<16x128xf32>
    %56 = arith.addf %52, %55 : vector<16x128xf32>
    %cst_29 = arith.constant 3.000000e+01 : f32
    %57 = vector.broadcast %cst_29 : f32 to vector<16x128xf32>
    %58 = arith.mulf %56, %57 : vector<16x128xf32>
    %c0_30 = arith.constant 0 : index
    %c0_31 = arith.constant 0 : index
    %59 = vector.load %arg8[%c0_30, %c0_31] : memref<16x128xf32, #tpu.memory_space<vmem>>, vector<16x128xf32>
    tpu.vector_store %arg8[%c0_30, %c0_31], %58 {strides = array<i32>} : memref<16x128xf32, #tpu.memory_space<vmem>>, vector<16x128xf32>,
    %cst_32 = arith.constant dense<0xFF800000> : vector<128xf32>
    %60 = vector.multi_reduction <maximumf>, %58, %cst_32 [0] : vector<16x128xf32> to vector<128xf32>
    %61 = vector.shape_cast %60 : vector<128xf32> to vector<1x128xf32>
    %62 = vector.broadcast %61 : vector<1x128xf32> to vector<16x128xf32>
    %63 = arith.subf %58, %62 : vector<16x128xf32>
    %64 = math.exp %63 : vector<16x128xf32>
    %cst_33 = arith.constant dense<0.000000e+00> : vector<128xf32>
    %65 = vector.multi_reduction <add>, %64, %cst_33 [0] : vector<16x128xf32> to vector<128xf32>
    %66 = vector.shape_cast %65 : vector<128xf32> to vector<1x128xf32>
    %67 = math.log %66 : vector<1x128xf32>
    %68 = arith.addf %67, %61 : vector<1x128xf32>
    %69 = arith.mulf %51, %58 : vector<16x128xf32>
    %cst_34 = arith.constant dense<0.000000e+00> : vector<128xf32>
    %70 = vector.multi_reduction <add>, %69, %cst_34 [0] : vector<16x128xf32> to vector<128xf32>
    %71 = vector.shape_cast %70 : vector<128xf32> to vector<1x128xf32>
    %72 = tpu.iota {dimensions = array<i32: 1>} : vector<1x128xi32>
    %c4_i32 = arith.constant 4 : i32
    %73 = vector.broadcast %c4_i32 : i32 to vector<1x128xi32>
    %74 = arith.cmpi slt, %72, %73 : vector<1x128xi32>
    %75 = arith.extui %74 : vector<1x128xi1> to vector<1x128xi32>
    %76 = arith.sitofp %75 : vector<1x128xi32> to vector<1x128xf32>
    %77 = arith.subf %68, %71 : vector<1x128xf32>
    %78 = arith.mulf %77, %76 : vector<1x128xf32>
    %79 = vector.shape_cast %78 : vector<1x128xf32> to vector<1x1x128xf32>
    %cst_35 = arith.constant dense<0.000000e+00> : vector<1xf32>
    %80 = vector.multi_reduction <add>, %79, %cst_35 [1, 2] : vector<1x1x128xf32> to vector<1xf32>
    %81 = vector.shape_cast %80 : vector<1xf32> to vector<1x1x1xf32>
    %82 = vector.extract %81[0, 0, 0] : f32 from vector<1x1x1xf32>
    %cst_36 = arith.constant 2.500000e-01 : f32
    %83 = arith.mulf %82, %cst_36 : f32
    %c0_37 = arith.constant 0 : index
    %c0_38 = arith.constant 0 : index
    %84 = memref.load %arg9[%c0_37, %c0_38] : memref<1x1xf32, #tpu.memory_space<smem>>
    memref.store %83, %arg9[%c0_37, %c0_38] : memref<1x1xf32, #tpu.memory_space<smem>>
    return
  }
}

</mosaic_0001>

<llo_original>
// kernel: shopee_forward.1
$region0: #{shopee_forward.1}
  #allocation0 [shape = 'u32[]', space=smem, size = 0x4, offset = 0x4, fixed_abs, tag = 'smem constant byte address 0x4 - core index']
  #allocation1 [shape = 'u32[144,128]{1,0:T(1,128)}', space=vmem, size = 0x12000, scoped, tag = 'internal scratch']
  %s0 = inlined_call_operand.vmem [shape: f32[8,1024], index: 0, kind: input, shape index: {}]
  %s1 = inlined_call_operand.vmem [shape: f32[64,8], index: 1, kind: input, shape index: {}]
  %s2 = inlined_call_operand.vmem [shape: f32[64,1], index: 2, kind: input, shape index: {}]
  %s3 = inlined_call_operand.vmem [shape: bf16[1024,128], index: 3, kind: input, shape index: {}]
  %s4 = inlined_call_operand.vmem [shape: bf16[32,64], index: 4, kind: input, shape index: {}]
  %s5 = inlined_call_operand.vmem [shape: f32[32,1], index: 5, kind: input, shape index: {}]
  %s6 = inlined_call_operand.vmem [shape: bf16[16,32], index: 6, kind: input, shape index: {}]
  %s7 = inlined_call_operand.vmem [shape: s32[1,128], index: 7, kind: input, shape index: {}]
  %s8 = inlined_call_operand.vmem [shape: f32[16,128], index: 8, kind: output, shape index: {0}]
  %s9 = inlined_call_operand.hbm [shape: f32[1,1], index: 9, kind: output, shape index: {1}]
  %10 = xla_tuple %s8, %s9
  %s11 = sld [smem:[#allocation0]]
  $region50: #{shopee_forward.1} parent=0
    _
  %s13 = ssub.s32 1, %s11
  %s14 = scalar_select 0, %s13, %s11
  $region1: #{shopee_forward.1} parent=0
    #allocation2 [shape = 'u8[512]{0}', space=smem, size = 0x200, scoped, tag = 'output window, operand 1, single buffered']
    #allocation3 [shape = 's32[1]{0}', space=sflag, size = 0x4, scoped, tag = 'scoped memory for shopee_forward.1']
    %15 = vsyncpa [#allocation3], 0
    // Predicated region
    $region2: #{shopee_forward.1} parent=1 // pred_check
      _
    $region3: #{shopee_forward.1} parent=1 // pred_check_branch
      %17 = sbr.rel (0) target = $region5
    $region4: #{shopee_forward.1} parent=1 // pred_region
      _
    $region5: #{shopee_forward.1} parent=1 // pred_fallthru
      _
    // Predicated region
    $region6: #{shopee_forward.1} parent=1 // pred_check
      _
    $region7: #{shopee_forward.1} parent=1 // pred_check_branch
      %19 = sbr.rel (0) target = $region9
    $region8: #{shopee_forward.1} parent=1 // pred_region
      _
    $region9: #{shopee_forward.1} parent=1 // pred_fallthru
      _
    // Predicated region
    $region10: #{shopee_forward.1} parent=1 // pred_check
      _
    $region11: #{shopee_forward.1} parent=1 // pred_check_branch
      %21 = sbr.rel (0) target = $region13
    $region12: #{shopee_forward.1} parent=1 // pred_region
      _
    $region13: #{shopee_forward.1} parent=1 // pred_fallthru
      _
    // Predicated region
    $region14: #{shopee_forward.1} parent=1 // pred_check
      _
    $region15: #{shopee_forward.1} parent=1 // pred_check_branch
      %23 = sbr.rel (0) target = $region17
    $region16: #{shopee_forward.1} parent=1 // pred_region
      _
    $region17: #{shopee_forward.1} parent=1 // pred_fallthru
      _
    // Predicated region
    $region18: #{shopee_forward.1} parent=1 // pred_check
      _
    $region19: #{shopee_forward.1} parent=1 // pred_check_branch
      %25 = sbr.rel (0) target = $region21
    $region20: #{shopee_forward.1} parent=1 // pred_region
      _
    $region21: #{shopee_forward.1} parent=1 // pred_fallthru
      _
    // Predicated region
    $region22: #{shopee_forward.1} parent=1 // pred_check
      _
    $region23: #{shopee_forward.1} parent=1 // pred_check_branch
      %27 = sbr.rel (0) target = $region25
    $region24: #{shopee_forward.1} parent=1 // pred_region
      _
    $region25: #{shopee_forward.1} parent=1 // pred_fallthru
      _
    // Predicated region
    $region26: #{shopee_forward.1} parent=1 // pred_check
      _
    $region27: #{shopee_forward.1} parent=1 // pred_check_branch
      %29 = sbr.rel (0) target = $region29
    $region28: #{shopee_forward.1} parent=1 // pred_region
      _
    $region29: #{shopee_forward.1} parent=1 // pred_fallthru
      _
    // Predicated region
    $region30: #{shopee_forward.1} parent=1 // pred_check
      _
    $region31: #{shopee_forward.1} parent=1 // pred_check_branch
      %31 = sbr.rel (0) target = $region33
    $region32: #{shopee_forward.1} parent=1 // pred_region
      _
    $region33: #{shopee_forward.1} parent=1 // pred_fallthru
      _
    %v33 = vld [vmem:[%s1] sm:$0xff]
    %v34 = vld [vmem:[%s1 + $0x8] sm:$0xff]
    %v35 = vld [vmem:[%s1 + $0x10] sm:$0xff]
    %v36 = vld [vmem:[%s1 + $0x18] sm:$0xff]
    %v37 = vld [vmem:[%s1 + $0x20] sm:$0xff]
    %v38 = vld [vmem:[%s1 + $0x28] sm:$0xff]
    %v39 = vld [vmem:[%s1 + $0x30] sm:$0xff]
    %v40 = vld [vmem:[%s1 + $0x38] sm:$0xff]
    %v41 = vld [vmem:[%s0] sm:$0xff]
    %v42 = vld [vmem:[%s0 + $0x8] sm:$0xff]
    %v43 = vld [vmem:[%s0 + $0x10] sm:$0xff]
    %v44 = vld [vmem:[%s0 + $0x18] sm:$0xff]
    %v45 = vld [vmem:[%s0 + $0x20] sm:$0xff]
    %v46 = vld [vmem:[%s0 + $0x28] sm:$0xff]
    %v47 = vld [vmem:[%s0 + $0x30] sm:$0xff]
    %v48 = vld [vmem:[%s0 + $0x38] sm:$0xff]
    %v49 = vld [vmem:[%s2] sm:$0xff]
    %v50 = vld [vmem:[%s2 + $0x8] sm:$0xff]
    %v51 = vld [vmem:[%s2 + $0x10] sm:$0xff]
    %v52 = vld [vmem:[%s2 + $0x18] sm:$0xff]
    %v53 = vld [vmem:[%s2 + $0x20] sm:$0xff]
    %v54 = vld [vmem:[%s2 + $0x28] sm:$0xff]
    %v55 = vld [vmem:[%s2 + $0x30] sm:$0xff]
    %v56 = vld [vmem:[%s2 + $0x38] sm:$0xff]
    %58 = vset.pattern.permute.xlu0 0
    %59 = vperm.xlu0 %58, %v49
    %v60 = vpop.permute.xlu0 %59
    %63 = vset.pattern.permute.xlu0 0
    %64 = vperm.xlu0 %63, %v50
    %v65 = vpop.permute.xlu0 %64
    %68 = vset.pattern.permute.xlu0 0
    %69 = vperm.xlu0 %68, %v51
    %v70 = vpop.permute.xlu0 %69
    %73 = vset.pattern.permute.xlu0 0
    %74 = vperm.xlu0 %73, %v52
    %v75 = vpop.permute.xlu0 %74
    %78 = vset.pattern.permute.xlu0 0
    %79 = vperm.xlu0 %78, %v53
    %v80 = vpop.permute.xlu0 %79
    %83 = vset.pattern.permute.xlu0 0
    %84 = vperm.xlu0 %83, %v54
    %v85 = vpop.permute.xlu0 %84
    %88 = vset.pattern.permute.xlu0 0
    %89 = vperm.xlu0 %88, %v55
    %v90 = vpop.permute.xlu0 %89
    %93 = vset.pattern.permute.xlu0 0
    %94 = vperm.xlu0 %93, %v56
    %v95 = vpop.permute.xlu0 %94
    %vm97 = vcmask 64512
    %v99 = vsel %vm97, %v33, 0
    %v102 = vsel %vm97, %v34, 0
    %v105 = vsel %vm97, %v35, 0
    %v108 = vsel %vm97, %v36, 0
    %v111 = vsel %vm97, %v37, 0
    %v114 = vsel %vm97, %v38, 0
    %v117 = vsel %vm97, %v39, 0
    %v120 = vsel %vm97, %v40, 0
    %122 = vmatprep.subr.mxu0 0.0
    %123 = vmatpush1.msra.mxu0 0.0
    %124 = vmatprep.subr.mxu0 0.0
    %125 = vmatpush1.msra.mxu0 0.0
    %126 = vmatprep.subr.mxu0 0.0
    %127 = vmatpush1.msra.mxu0 0.0
    %128 = vmatprep.subr.mxu0 0.0
    %129 = vmatpush1.msra.mxu0 0.0
    %130 = vmatprep.subr.mxu0 0.0
    %131 = vmatpush1.msra.mxu0 0.0
    %132 = vmatprep.subr.mxu0 0.0
    %133 = vmatpush1.msra.mxu0 0.0
    %134 = vmatprep.subr.mxu0 0.0
    %135 = vmatpush1.msra.mxu0 0.0
    %136 = vmatprep.subr.mxu0 0.0
    %137 = vmatpush1.msra.mxu0 0.0
    %138 = vmatprep.subr.mxu0 0.0
    %139 = vmatpush1.msra.mxu0 0.0
    %140 = vmatprep.subr.mxu0 0.0
    %141 = vmatpush1.msra.mxu0 0.0
    %142 = vmatprep.subr.mxu0 0.0
    %143 = vmatpush1.msra.mxu0 0.0
    %144 = vmatprep.subr.mxu0 0.0
    %145 = vmatpush1.msra.mxu0 0.0
    %146 = vmatprep.subr.mxu0 0.0
    %147 = vmatpush1.msra.mxu0 0.0
    %148 = vmatprep.subr.mxu0 0.0
    %149 = vmatpush1.msra.mxu0 0.0
    %150 = vmatprep.subr.mxu0 0.0
    %151 = vmatpush1.msra.mxu0 0.0
    %152 = vmatprep.subr.mxu0 %v42
    %153 = vmatpush1.msra.mxu0 %v41
    %154 = vmatprep.subr.mxu0 0.0
    %155 = vmatpush2.msra.mxu0 0.0
    %156 = vmatprep.subr.mxu0 0.0
    %157 = vmatpush2.msra.mxu0 0.0
    %158 = vmatprep.subr.mxu0 0.0
    %159 = vmatpush2.msra.mxu0 0.0
    %160 = vmatprep.subr.mxu0 0.0
    %161 = vmatpush2.msra.mxu0 0.0
    %162 = vmatprep.subr.mxu0 0.0
    %163 = vmatpush2.msra.mxu0 0.0
    %164 = vmatprep.subr.mxu0 0.0
    %165 = vmatpush2.msra.mxu0 0.0
    %166 = vmatprep.subr.mxu0 0.0
    %167 = vmatpush2.msra.mxu0 0.0
    %168 = vmatprep.subr.mxu0 0.0
    %169 = vmatpush2.msra.mxu0 0.0
    %170 = vmatprep.subr.mxu0 0.0
    %171 = vmatpush2.msra.mxu0 0.0
    %172 = vmatprep.subr.mxu0 0.0
    %173 = vmatpush2.msra.mxu0 0.0
    %174 = vmatprep.subr.mxu0 0.0
    %175 = vmatpush2.msra.mxu0 0.0
    %176 = vmatprep.subr.mxu0 0.0
    %177 = vmatpush2.msra.mxu0 0.0
    %178 = vmatprep.subr.mxu0 0.0
    %179 = vmatpush2.msra.mxu0 0.0
    %180 = vmatprep.subr.mxu0 0.0
    %181 = vmatpush2.msra.mxu0 0.0
    %182 = vmatprep.subr.mxu0 0.0
    %183 = vmatpush2.msra.mxu0 0.0
    %184 = vmatprep.subr.mxu0 0.0
    %185 = vmatpush2.msra.mxu0 0.0
    %186 = vmatprep.mubr.f32.mxu0 0.0
    %187 = vmatmul.mubr.f32.gmra.mxu0 %v99
    %v188 = vpop.f32.mrf.mxu0
    %v189 = vadd.f32 %v60, %v188
    %v190 = vpop.f32.mrf.mxu0
    %v191 = vadd.f32 %v60, %v190
    %192 = vmatprep.mubr.f32.mxu0 0.0
    %193 = vmatmul.mubr.f32.gmra.mxu0 %v102
    %v194 = vpop.f32.mrf.mxu0
    %v195 = vadd.f32 %v65, %v194
    %v196 = vpop.f32.mrf.mxu0
    %v197 = vadd.f32 %v65, %v196
    %198 = vmatprep.mubr.f32.mxu0 0.0
    %199 = vmatmul.mubr.f32.gmra.mxu0 %v105
    %v200 = vpop.f32.mrf.mxu0
    %v201 = vadd.f32 %v70, %v200
    %v202 = vpop.f32.mrf.mxu0
    %v203 = vadd.f32 %v70, %v202
    %204 = vmatprep.mubr.f32.mxu0 0.0
    %205 = vmatmul.mubr.f32.gmra.mxu0 %v108
    %v206 = vpop.f32.mrf.mxu0
    %v207 = vadd.f32 %v75, %v206
    %v208 = vpop.f32.mrf.mxu0
    %v209 = vadd.f32 %v75, %v208
    %210 = vmatprep.mubr.f32.mxu0 0.0
    %211 = vmatmul.mubr.f32.gmra.mxu0 %v111
    %v212 = vpop.f32.mrf.mxu0
    %v213 = vadd.f32 %v80, %v212
    %v214 = vpop.f32.mrf.mxu0
    %v215 = vadd.f32 %v80, %v214
    %216 = vmatprep.mubr.f32.mxu0 0.0
    %217 = vmatmul.mubr.f32.gmra.mxu0 %v114
    %v218 = vpop.f32.mrf.mxu0
    %v219 = vadd.f32 %v85, %v218
    %v220 = vpop.f32.mrf.mxu0
    %v221 = vadd.f32 %v85, %v220
    %222 = vmatprep.mubr.f32.mxu0 0.0
    %223 = vmatmul.mubr.f32.gmra.mxu0 %v117
    %v224 = vpop.f32.mrf.mxu0
    %v225 = vadd.f32 %v90, %v224
    %v226 = vpop.f32.mrf.mxu0
    %v227 = vadd.f32 %v90, %v226
    %228 = vmatprep.mubr.f32.mxu0 0.0
    %229 = vmatmul.mubr.f32.gmra.mxu0 %v120
    %v230 = vpop.f32.mrf.mxu0
    %v231 = vadd.f32 %v95, %v230
    %v232 = vpop.f32.mrf.mxu0
    %v233 = vadd.f32 %v95, %v232
    %234 = vdwg.mxu0
    %235 = vmatprep.subr.mxu0 0.0
    %236 = vmatpush1.msra.mxu0 0.0
    %237 = vmatprep.subr.mxu0 0.0
    %238 = vmatpush1.msra.mxu0 0.0
    %239 = vmatprep.subr.mxu0 0.0
    %240 = vmatpush1.msra.mxu0 0.0
    %241 = vmatprep.subr.mxu0 0.0
    %242 = vmatpush1.msra.mxu0 0.0
    %243 = vmatprep.subr.mxu0 0.0
    %244 = vmatpush1.msra.mxu0 0.0
    %245 = vmatprep.subr.mxu0 0.0
    %246 = vmatpush1.msra.mxu0 0.0
    %247 = vmatprep.subr.mxu0 0.0
    %248 = vmatpush1.msra.mxu0 0.0
    %249 = vmatprep.subr.mxu0 0.0
    %250 = vmatpush1.msra.mxu0 0.0
    %251 = vmatprep.subr.mxu0 0.0
    %252 = vmatpush1.msra.mxu0 0.0
    %253 = vmatprep.subr.mxu0 0.0
    %254 = vmatpush1.msra.mxu0 0.0
    %255 = vmatprep.subr.mxu0 0.0
    %256 = vmatpush1.msra.mxu0 0.0
    %257 = vmatprep.subr.mxu0 0.0
    %258 = vmatpush1.msra.mxu0 0.0
    %259 = vmatprep.subr.mxu0 0.0
    %260 = vmatpush1.msra.mxu0 0.0
    %261 = vmatprep.subr.mxu0 0.0
    %262 = vmatpush1.msra.mxu0 0.0
    %263 = vmatprep.subr.mxu0 0.0
    %264 = vmatpush1.msra.mxu0 0.0
    %265 = vmatprep.subr.mxu0 %v44
    %266 = vmatpush1.msra.mxu0 %v43
    %267 = vmatprep.subr.mxu0 0.0
    %268 = vmatpush2.msra.mxu0 0.0
    %269 = vmatprep.subr.mxu0 0.0
    %270 = vmatpush2.msra.mxu0 0.0
    %271 = vmatprep.subr.mxu0 0.0
    %272 = vmatpush2.msra.mxu0 0.0
    %273 = vmatprep.subr.mxu0 0.0
    %274 = vmatpush2.msra.mxu0 0.0
    %275 = vmatprep.subr.mxu0 0.0
    %276 = vmatpush2.msra.mxu0 0.0
    %277 = vmatprep.subr.mxu0 0.0
    %278 = vmatpush2.msra.mxu0 0.0
    %279 = vmatprep.subr.mxu0 0.0
    %280 = vmatpush2.msra.mxu0 0.0
    %281 = vmatprep.subr.mxu0 0.0
    %282 = vmatpush2.msra.mxu0 0.0
    %283 = vmatprep.subr.mxu0 0.0
    %284 = vmatpush2.msra.mxu0 0.0
    %285 = vmatprep.subr.mxu0 0.0
    %286 = vmatpush2.msra.mxu0 0.0
    %287 = vmatprep.subr.mxu0 0.0
    %288 = vmatpush2.msra.mxu0 0.0
    %289 = vmatprep.subr.mxu0 0.0
    %290 = vmatpush2.msra.mxu0 0.0
    %291 = vmatprep.subr.mxu0 0.0
    %292 = vmatpush2.msra.mxu0 0.0
    %293 = vmatprep.subr.mxu0 0.0
    %294 = vmatpush2.msra.mxu0 0.0
    %295 = vmatprep.subr.mxu0 0.0
    %296 = vmatpush2.msra.mxu0 0.0
    %297 = vmatprep.subr.mxu0 0.0
    %298 = vmatpush2.msra.mxu0 0.0
    %299 = vmatprep.mubr.f32.mxu0 0.0
    %300 = vmatmul.mubr.f32.gmra.mxu0 %v99
    %v301 = vpop.f32.mrf.mxu0
    %v302 = vadd.f32 %v60, %v301
    %v303 = vpop.f32.mrf.mxu0
    %v304 = vadd.f32 %v60, %v303
    %305 = vmatprep.mubr.f32.mxu0 0.0
    %306 = vmatmul.mubr.f32.gmra.mxu0 %v102
    %v307 = vpop.f32.mrf.mxu0
    %v308 = vadd.f32 %v65, %v307
    %v309 = vpop.f32.mrf.mxu0
    %v310 = vadd.f32 %v65, %v309
    %311 = vmatprep.mubr.f32.mxu0 0.0
    %312 = vmatmul.mubr.f32.gmra.mxu0 %v105
    %v313 = vpop.f32.mrf.mxu0
    %v314 = vadd.f32 %v70, %v313
    %v315 = vpop.f32.mrf.mxu0
    %v316 = vadd.f32 %v70, %v315
    %317 = vmatprep.mubr.f32.mxu0 0.0
    %318 = vmatmul.mubr.f32.gmra.mxu0 %v108
    %v319 = vpop.f32.mrf.mxu0
    %v320 = vadd.f32 %v75, %v319
    %v321 = vpop.f32.mrf.mxu0
    %v322 = vadd.f32 %v75, %v321
    %323 = vmatprep.mubr.f32.mxu0 0.0
    %324 = vmatmul.mubr.f32.gmra.mxu0 %v111
    %v325 = vpop.f32.mrf.mxu0
    %v326 = vadd.f32 %v80, %v325
    %v327 = vpop.f32.mrf.mxu0
    %v328 = vadd.f32 %v80, %v327
    %329 = vmatprep.mubr.f32.mxu0 0.0
    %330 = vmatmul.mubr.f32.gmra.mxu0 %v114
    %v331 = vpop.f32.mrf.mxu0
    %v332 = vadd.f32 %v85, %v331
    %v333 = vpop.f32.mrf.mxu0
    %v334 = vadd.f32 %v85, %v333
    %335 = vmatprep.mubr.f32.mxu0 0.0
    %336 = vmatmul.mubr.f32.gmra.mxu0 %v117
    %v337 = vpop.f32.mrf.mxu0
    %v338 = vadd.f32 %v90, %v337
    %v339 = vpop.f32.mrf.mxu0
    %v340 = vadd.f32 %v90, %v339
    %341 = vmatprep.mubr.f32.mxu0 0.0
    %342 = vmatmul.mubr.f32.gmra.mxu0 %v120
    %v343 = vpop.f32.mrf.mxu0
    %v344 = vadd.f32 %v95, %v343
    %v345 = vpop.f32.mrf.mxu0
    %v346 = vadd.f32 %v95, %v345
    %347 = vdwg.mxu0
    %348 = vmatprep.subr.mxu0 0.0
    %349 = vmatpush1.msra.mxu0 0.0
    %350 = vmatprep.subr.mxu0 0.0
    %351 = vmatpush1.msra.mxu0 0.0
    %352 = vmatprep.subr.mxu0 0.0
    %353 = vmatpush1.msra.mxu0 0.0
    %354 = vmatprep.subr.mxu0 0.0
    %355 = vmatpush1.msra.mxu0 0.0
    %356 = vmatprep.subr.mxu0 0.0
    %357 = vmatpush1.msra.mxu0 0.0
    %358 = vmatprep.subr.mxu0 0.0
    %359 = vmatpush1.msra.mxu0 0.0
    %360 = vmatprep.subr.mxu0 0.0
    %361 = vmatpush1.msra.mxu0 0.0
    %362 = vmatprep.subr.mxu0 0.0
    %363 = vmatpush1.msra.mxu0 0.0
    %364 = vmatprep.subr.mxu0 0.0
    %365 = vmatpush1.msra.mxu0 0.0
    %366 = vmatprep.subr.mxu0 0.0
    %367 = vmatpush1.msra.mxu0 0.0
    %368 = vmatprep.subr.mxu0 0.0
    %369 = vmatpush1.msra.mxu0 0.0
    %370 = vmatprep.subr.mxu0 0.0
    %371 = vmatpush1.msra.mxu0 0.0
    %372 = vmatprep.subr.mxu0 0.0
    %373 = vmatpush1.msra.mxu0 0.0
    %374 = vmatprep.subr.mxu0 0.0
    %375 = vmatpush1.msra.mxu0 0.0
    %376 = vmatprep.subr.mxu0 0.0
    %377 = vmatpush1.msra.mxu0 0.0
    %378 = vmatprep.subr.mxu0 %v46
    %379 = vmatpush1.msra.mxu0 %v45
    %380 = vmatprep.subr.mxu0 0.0
    %381 = vmatpush2.msra.mxu0 0.0
    %382 = vmatprep.subr.mxu0 0.0
    %383 = vmatpush2.msra.mxu0 0.0
    %384 = vmatprep.subr.mxu0 0.0
    %385 = vmatpush2.msra.mxu0 0.0
    %386 = vmatprep.subr.mxu0 0.0
    %387 = vmatpush2.msra.mxu0 0.0
    %388 = vmatprep.subr.mxu0 0.0
    %389 = vmatpush2.msra.mxu0 0.0
    %390 = vmatprep.subr.mxu0 0.0
    %391 = vmatpush2.msra.mxu0 0.0
    %392 = vmatprep.subr.mxu0 0.0
    %393 = vmatpush2.msra.mxu0 0.0
    %394 = vmatprep.subr.mxu0 0.0
    %395 = vmatpush2.msra.mxu0 0.0
    %396 = vmatprep.subr.mxu0 0.0
    %397 = vmatpush2.msra.mxu0 0.0
    %398 = vmatprep.subr.mxu0 0.0
    %399 = vmatpush2.msra.mxu0 0.0
    %400 = vmatprep.subr.mxu0 0.0
    %401 = vmatpush2.msra.mxu0 0.0
    %402 = vmatprep.subr.mxu0 0.0
    %403 = vmatpush2.msra.mxu0 0.0
    %404 = vmatprep.subr.mxu0 0.0
    %405 = vmatpush2.msra.mxu0 0.0
    %406 = vmatprep.subr.mxu0 0.0
    %407 = vmatpush2.msra.mxu0 0.0
    %408 = vmatprep.subr.mxu0 0.0
    %409 = vmatpush2.msra.mxu0 0.0
    %410 = vmatprep.subr.mxu0 0.0
    %411 = vmatpush2.msra.mxu0 0.0
    %412 = vmatprep.mubr.f32.mxu0 0.0
    %413 = vmatmul.mubr.f32.gmra.mxu0 %v99
    %v414 = vpop.f32.mrf.mxu0
    %v415 = vadd.f32 %v60, %v414
    %v416 = vpop.f32.mrf.mxu0
    %v417 = vadd.f32 %v60, %v416
    %418 = vmatprep.mubr.f32.mxu0 0.0
    %419 = vmatmul.mubr.f32.gmra.mxu0 %v102
    %v420 = vpop.f32.mrf.mxu0
    %v421 = vadd.f32 %v65, %v420
    %v422 = vpop.f32.mrf.mxu0
    %v423 = vadd.f32 %v65, %v422
    %424 = vmatprep.mubr.f32.mxu0 0.0
    %425 = vmatmul.mubr.f32.gmra.mxu0 %v105
    %v426 = vpop.f32.mrf.mxu0
    %v427 = vadd.f32 %v70, %v426
    %v428 = vpop.f32.mrf.mxu0
    %v429 = vadd.f32 %v70, %v428
    %430 = vmatprep.mubr.f32.mxu0 0.0
    %431 = vmatmul.mubr.f32.gmra.mxu0 %v108
    %v432 = vpop.f32.mrf.mxu0
    %v433 = vadd.f32 %v75, %v432
    %v434 = vpop.f32.mrf.mxu0
    %v435 = vadd.f32 %v75, %v434
    %436 = vmatprep.mubr.f32.mxu0 0.0
    %437 = vmatmul.mubr.f32.gmra.mxu0 %v111
    %v438 = vpop.f32.mrf.mxu0
    %v439 = vadd.f32 %v80, %v438
    %v440 = vpop.f32.mrf.mxu0
    %v441 = vadd.f32 %v80, %v440
    %442 = vmatprep.mubr.f32.mxu0 0.0
    %443 = vmatmul.mubr.f32.gmra.mxu0 %v114
    %v444 = vpop.f32.mrf.mxu0
    %v445 = vadd.f32 %v85, %v444
    %v446 = vpop.f32.mrf.mxu0
    %v447 = vadd.f32 %v85, %v446
    %448 = vmatprep.mubr.f32.mxu0 0.0
    %449 = vmatmul.mubr.f32.gmra.mxu0 %v117
    %v450 = vpop.f32.mrf.mxu0
    %v451 = vadd.f32 %v90, %v450
    %v452 = vpop.f32.mrf.mxu0
    %v453 = vadd.f32 %v90, %v452
    %454 = vmatprep.mubr.f32.mxu0 0.0
    %455 = vmatmul.mubr.f32.gmra.mxu0 %v120
    %v456 = vpop.f32.mrf.mxu0
    %v457 = vadd.f32 %v95, %v456
    %v458 = vpop.f32.mrf.mxu0
    %v459 = vadd.f32 %v95, %v458
    %460 = vdwg.mxu0
    %461 = vmatprep.subr.mxu0 0.0
    %462 = vmatpush1.msra.mxu0 0.0
    %463 = vmatprep.subr.mxu0 0.0
    %464 = vmatpush1.msra.mxu0 0.0
    %465 = vmatprep.subr.mxu0 0.0
    %466 = vmatpush1.msra.mxu0 0.0
    %467 = vmatprep.subr.mxu0 0.0
    %468 = vmatpush1.msra.mxu0 0.0
    %469 = vmatprep.subr.mxu0 0.0
    %470 = vmatpush1.msra.mxu0 0.0
    %471 = vmatprep.subr.mxu0 0.0
    %472 = vmatpush1.msra.mxu0 0.0
    %473 = vmatprep.subr.mxu0 0.0
    %474 = vmatpush1.msra.mxu0 0.0
    %475 = vmatprep.subr.mxu0 0.0
    %476 = vmatpush1.msra.mxu0 0.0
    %477 = vmatprep.subr.mxu0 0.0
    %478 = vmatpush1.msra.mxu0 0.0
    %479 = vmatprep.subr.mxu0 0.0
    %480 = vmatpush1.msra.mxu0 0.0
    %481 = vmatprep.subr.mxu0 0.0
    %482 = vmatpush1.msra.mxu0 0.0
    %483 = vmatprep.subr.mxu0 0.0
    %484 = vmatpush1.msra.mxu0 0.0
    %485 = vmatprep.subr.mxu0 0.0
    %486 = vmatpush1.msra.mxu0 0.0
    %487 = vmatprep.subr.mxu0 0.0
    %488 = vmatpush1.msra.mxu0 0.0
    %489 = vmatprep.subr.mxu0 0.0
    %490 = vmatpush1.msra.mxu0 0.0
    %491 = vmatprep.subr.mxu0 %v48
    %492 = vmatpush1.msra.mxu0 %v47
    %493 = vmatprep.subr.mxu0 0.0
    %494 = vmatpush2.msra.mxu0 0.0
    %495 = vmatprep.subr.mxu0 0.0
    %496 = vmatpush2.msra.mxu0 0.0
    %497 = vmatprep.subr.mxu0 0.0
    %498 = vmatpush2.msra.mxu0 0.0
    %499 = vmatprep.subr.mxu0 0.0
    %500 = vmatpush2.msra.mxu0 0.0
    %501 = vmatprep.subr.mxu0 0.0
    %502 = vmatpush2.msra.mxu0 0.0
    %503 = vmatprep.subr.mxu0 0.0
    %504 = vmatpush2.msra.mxu0 0.0
    %505 = vmatprep.subr.mxu0 0.0
    %506 = vmatpush2.msra.mxu0 0.0
    %507 = vmatprep.subr.mxu0 0.0
    %508 = vmatpush2.msra.mxu0 0.0
    %509 = vmatprep.subr.mxu0 0.0
    %510 = vmatpush2.msra.mxu0 0.0
    %511 = vmatprep.subr.mxu0 0.0
    %512 = vmatpush2.msra.mxu0 0.0
    %513 = vmatprep.subr.mxu0 0.0
    %514 = vmatpush2.msra.mxu0 0.0
    %515 = vmatprep.subr.mxu0 0.0
    %516 = vmatpush2.msra.mxu0 0.0
    %517 = vmatprep.subr.mxu0 0.0
    %518 = vmatpush2.msra.mxu0 0.0
    %519 = vmatprep.subr.mxu0 0.0
    %520 = vmatpush2.msra.mxu0 0.0
    %521 = vmatprep.subr.mxu0 0.0
    %522 = vmatpush2.msra.mxu0 0.0
    %523 = vmatprep.subr.mxu0 0.0
    %524 = vmatpush2.msra.mxu0 0.0
    %525 = vmatprep.mubr.f32.mxu0 0.0
    %526 = vmatmul.mubr.f32.gmra.mxu0 %v99
    %v527 = vpop.f32.mrf.mxu0
    %v528 = vadd.f32 %v60, %v527
    %v529 = vpop.f32.mrf.mxu0
    %v530 = vadd.f32 %v60, %v529
    %531 = vmatprep.mubr.f32.mxu0 0.0
    %532 = vmatmul.mubr.f32.gmra.mxu0 %v102
    %v533 = vpop.f32.mrf.mxu0
    %v534 = vadd.f32 %v65, %v533
    %v535 = vpop.f32.mrf.mxu0
    %v536 = vadd.f32 %v65, %v535
    %537 = vmatprep.mubr.f32.mxu0 0.0
    %538 = vmatmul.mubr.f32.gmra.mxu0 %v105
    %v539 = vpop.f32.mrf.mxu0
    %v540 = vadd.f32 %v70, %v539
    %v541 = vpop.f32.mrf.mxu0
    %v542 = vadd.f32 %v70, %v541
    %543 = vmatprep.mubr.f32.mxu0 0.0
    %544 = vmatmul.mubr.f32.gmra.mxu0 %v108
    %v545 = vpop.f32.mrf.mxu0
    %v546 = vadd.f32 %v75, %v545
    %v547 = vpop.f32.mrf.mxu0
    %v548 = vadd.f32 %v75, %v547
    %549 = vmatprep.mubr.f32.mxu0 0.0
    %550 = vmatmul.mubr.f32.gmra.mxu0 %v111
    %v551 = vpop.f32.mrf.mxu0
    %v552 = vadd.f32 %v80, %v551
    %v553 = vpop.f32.mrf.mxu0
    %v554 = vadd.f32 %v80, %v553
    %555 = vmatprep.mubr.f32.mxu0 0.0
    %556 = vmatmul.mubr.f32.gmra.mxu0 %v114
    %v557 = vpop.f32.mrf.mxu0
    %v558 = vadd.f32 %v85, %v557
    %v559 = vpop.f32.mrf.mxu0
    %v560 = vadd.f32 %v85, %v559
    %561 = vmatprep.mubr.f32.mxu0 0.0
    %562 = vmatmul.mubr.f32.gmra.mxu0 %v117
    %v563 = vpop.f32.mrf.mxu0
    %v564 = vadd.f32 %v90, %v563
    %v565 = vpop.f32.mrf.mxu0
    %v566 = vadd.f32 %v90, %v565
    %567 = vmatprep.mubr.f32.mxu0 0.0
    %568 = vmatmul.mubr.f32.gmra.mxu0 %v120
    %v569 = vpop.f32.mrf.mxu0
    %v570 = vadd.f32 %v95, %v569
    %v571 = vpop.f32.mrf.mxu0
    %v572 = vadd.f32 %v95, %v571
    %573 = vdwg.mxu0
    %v574 = vmax.f32 %v189, 0.0
    %v575 = vmax.f32 %v191, 0.0
    %v576 = vmax.f32 %v302, 0.0
    %v577 = vmax.f32 %v304, 0.0
    %v578 = vmax.f32 %v415, 0.0
    %v579 = vmax.f32 %v417, 0.0
    %v580 = vmax.f32 %v528, 0.0
    %v581 = vmax.f32 %v530, 0.0
    %v582 = vmax.f32 %v195, 0.0
    %v583 = vmax.f32 %v197, 0.0
    %v584 = vmax.f32 %v308, 0.0
    %v585 = vmax.f32 %v310, 0.0
    %v586 = vmax.f32 %v421, 0.0
    %v587 = vmax.f32 %v423, 0.0
    %v588 = vmax.f32 %v534, 0.0
    %v589 = vmax.f32 %v536, 0.0
    %v590 = vmax.f32 %v201, 0.0
    %v591 = vmax.f32 %v203, 0.0
    %v592 = vmax.f32 %v314, 0.0
    %v593 = vmax.f32 %v316, 0.0
    %v594 = vmax.f32 %v427, 0.0
    %v595 = vmax.f32 %v429, 0.0
    %v596 = vmax.f32 %v540, 0.0
    %v597 = vmax.f32 %v542, 0.0
    %v598 = vmax.f32 %v207, 0.0
    %v599 = vmax.f32 %v209, 0.0
    %v600 = vmax.f32 %v320, 0.0
    %v601 = vmax.f32 %v322, 0.0
    %v602 = vmax.f32 %v433, 0.0
    %v603 = vmax.f32 %v435, 0.0
    %v604 = vmax.f32 %v546, 0.0
    %v605 = vmax.f32 %v548, 0.0
    %v606 = vmax.f32 %v213, 0.0
    %v607 = vmax.f32 %v215, 0.0
    %v608 = vmax.f32 %v326, 0.0
    %v609 = vmax.f32 %v328, 0.0
    %v610 = vmax.f32 %v439, 0.0
    %v611 = vmax.f32 %v441, 0.0
    %v612 = vmax.f32 %v552, 0.0
    %v613 = vmax.f32 %v554, 0.0
    %v614 = vmax.f32 %v219, 0.0
    %v615 = vmax.f32 %v221, 0.0
    %v616 = vmax.f32 %v332, 0.0
    %v617 = vmax.f32 %v334, 0.0
    %v618 = vmax.f32 %v445, 0.0
    %v619 = vmax.f32 %v447, 0.0
    %v620 = vmax.f32 %v558, 0.0
    %v621 = vmax.f32 %v560, 0.0
    %v622 = vmax.f32 %v225, 0.0
    %v623 = vmax.f32 %v227, 0.0
    %v624 = vmax.f32 %v338, 0.0
    %v625 = vmax.f32 %v340, 0.0
    %v626 = vmax.f32 %v451, 0.0
    %v627 = vmax.f32 %v453, 0.0
    %v628 = vmax.f32 %v564, 0.0
    %v629 = vmax.f32 %v566, 0.0
    %v630 = vmax.f32 %v231, 0.0
    %v631 = vmax.f32 %v233, 0.0
    %v632 = vmax.f32 %v344, 0.0
    %v633 = vmax.f32 %v346, 0.0
    %v634 = vmax.f32 %v457, 0.0
    %v635 = vmax.f32 %v459, 0.0
    %v636 = vmax.f32 %v570, 0.0
    %v637 = vmax.f32 %v572, 0.0
    %v638 = vpack.c.bf16 %v582, %v574
    %v639 = vpack.c.bf16 %v583, %v575
    %v640 = vpack.c.bf16 %v584, %v576
    %v641 = vpack.c.bf16 %v585, %v577
    %v642 = vpack.c.bf16 %v586, %v578
    %v643 = vpack.c.bf16 %v587, %v579
    %v644 = vpack.c.bf16 %v588, %v580
    %v645 = vpack.c.bf16 %v589, %v581
    %v646 = vpack.c.bf16 %v598, %v590
    %v647 = vpack.c.bf16 %v599, %v591
    %v648 = vpack.c.bf16 %v600, %v592
    %v649 = vpack.c.bf16 %v601, %v593
    %v650 = vpack.c.bf16 %v602, %v594
    %v651 = vpack.c.bf16 %v603, %v595
    %v652 = vpack.c.bf16 %v604, %v596
    %v653 = vpack.c.bf16 %v605, %v597
    %v654 = vpack.c.bf16 %v614, %v606
    %v655 = vpack.c.bf16 %v615, %v607
    %v656 = vpack.c.bf16 %v616, %v608
    %v657 = vpack.c.bf16 %v617, %v609
    %v658 = vpack.c.bf16 %v618, %v610
    %v659 = vpack.c.bf16 %v619, %v611
    %v660 = vpack.c.bf16 %v620, %v612
    %v661 = vpack.c.bf16 %v621, %v613
    %v662 = vpack.c.bf16 %v630, %v622
    %v663 = vpack.c.bf16 %v631, %v623
    %v664 = vpack.c.bf16 %v632, %v624
    %v665 = vpack.c.bf16 %v633, %v625
    %v666 = vpack.c.bf16 %v634, %v626
    %v667 = vpack.c.bf16 %v635, %v627
    %v668 = vpack.c.bf16 %v636, %v628
    %v669 = vpack.c.bf16 %v637, %v629
    %v670 = vld [vmem:[%s3] sm:$0xf]
    %v671 = vld [vmem:[%s3 + $0x4] sm:$0xf]
    %v672 = vld [vmem:[%s3 + $0x8] sm:$0xf]
    %v673 = vld [vmem:[%s3 + $0xc] sm:$0xf]
    %v674 = vld [vmem:[%s3 + $0x10] sm:$0xf]
    %v675 = vld [vmem:[%s3 + $0x14] sm:$0xf]
    %v676 = vld [vmem:[%s3 + $0x18] sm:$0xf]
    %v677 = vld [vmem:[%s3 + $0x1c] sm:$0xf]
    %v678 = vld [vmem:[%s3 + $0x20] sm:$0xf]
    %v679 = vld [vmem:[%s3 + $0x24] sm:$0xf]
    %v680 = vld [vmem:[%s3 + $0x28] sm:$0xf]
    %v681 = vld [vmem:[%s3 + $0x2c] sm:$0xf]
    %v682 = vld [vmem:[%s3 + $0x30] sm:$0xf]
    %v683 = vld [vmem:[%s3 + $0x34] sm:$0xf]
    %v684 = vld [vmem:[%s3 + $0x38] sm:$0xf]
    %v685 = vld [vmem:[%s3 + $0x3c] sm:$0xf]
    %v686 = vld [vmem:[%s3 + $0x40] sm:$0xf]
    %v687 = vld [vmem:[%s3 + $0x44] sm:$0xf]
    %v688 = vld [vmem:[%s3 + $0x48] sm:$0xf]
    %v689 = vld [vmem:[%s3 + $0x4c] sm:$0xf]
    %v690 = vld [vmem:[%s3 + $0x50] sm:$0xf]
    %v691 = vld [vmem:[%s3 + $0x54] sm:$0xf]
    %v692 = vld [vmem:[%s3 + $0x58] sm:$0xf]
    %v693 = vld [vmem:[%s3 + $0x5c] sm:$0xf]
    %v694 = vld [vmem:[%s3 + $0x60] sm:$0xf]
    %v695 = vld [vmem:[%s3 + $0x64] sm:$0xf]
    %v696 = vld [vmem:[%s3 + $0x68] sm:$0xf]
    %v697 = vld [vmem:[%s3 + $0x6c] sm:$0xf]
    %v698 = vld [vmem:[%s3 + $0x70] sm:$0xf]
    %v699 = vld [vmem:[%s3 + $0x74] sm:$0xf]
    %v700 = vld [vmem:[%s3 + $0x78] sm:$0xf]
    %v701 = vld [vmem:[%s3 + $0x7c] sm:$0xf]
    %v702 = vld [vmem:[%s3 + $0x80] sm:$0xf]
    %v703 = vld [vmem:[%s3 + $0x84] sm:$0xf]
    %v704 = vld [vmem:[%s3 + $0x88] sm:$0xf]
    %v705 = vld [vmem:[%s3 + $0x8c] sm:$0xf]
    %v706 = vld [vmem:[%s3 + $0x90] sm:$0xf]
    %v707 = vld [vmem:[%s3 + $0x94] sm:$0xf]
    %v708 = vld [vmem:[%s3 + $0x98] sm:$0xf]
    %v709 = vld [vmem:[%s3 + $0x9c] sm:$0xf]
    %v710 = vld [vmem:[%s3 + $0xa0] sm:$0xf]
    %v711 = vld [vmem:[%s3 + $0xa4] sm:$0xf]
    %v712 = vld [vmem:[%s3 + $0xa8] sm:$0xf]
    %v713 = vld [vmem:[%s3 + $0xac] sm:$0xf]
    %v714 = vld [vmem:[%s3 + $0xb0] sm:$0xf]
    %v715 = vld [vmem:[%s3 + $0xb4] sm:$0xf]
    %v716 = vld [vmem:[%s3 + $0xb8] sm:$0xf]
    %v717 = vld [vmem:[%s3 + $0xbc] sm:$0xf]
    %v718 = vld [vmem:[%s3 + $0xc0] sm:$0xf]
    %v719 = vld [vmem:[%s3 + $0xc4] sm:$0xf]
    %v720 = vld [vmem:[%s3 + $0xc8] sm:$0xf]
    %v721 = vld [vmem:[%s3 + $0xcc] sm:$0xf]
    %v722 = vld [vmem:[%s3 + $0xd0] sm:$0xf]
    %v723 = vld [vmem:[%s3 + $0xd4] sm:$0xf]
    %v724 = vld [vmem:[%s3 + $0xd8] sm:$0xf]
    %v725 = vld [vmem:[%s3 + $0xdc] sm:$0xf]
    %v726 = vld [vmem:[%s3 + $0xe0] sm:$0xf]
    %v727 = vld [vmem:[%s3 + $0xe4] sm:$0xf]
    %v728 = vld [vmem:[%s3 + $0xe8] sm:$0xf]
    %v729 = vld [vmem:[%s3 + $0xec] sm:$0xf]
    %v730 = vld [vmem:[%s3 + $0xf0] sm:$0xf]
    %v731 = vld [vmem:[%s3 + $0xf4] sm:$0xf]
    %v732 = vld [vmem:[%s3 + $0xf8] sm:$0xf]
    %v733 = vld [vmem:[%s3 + $0xfc] sm:$0xf]
    %v734 = vld [vmem:[%s3 + $0x100] sm:$0xf]
    %v735 = vld [vmem:[%s3 + $0x104] sm:$0xf]
    %v736 = vld [vmem:[%s3 + $0x108] sm:$0xf]
    %v737 = vld [vmem:[%s3 + $0x10c] sm:$0xf]
    %v738 = vld [vmem:[%s3 + $0x110] sm:$0xf]
    %v739 = vld [vmem:[%s3 + $0x114] sm:$0xf]
    %v740 = vld [vmem:[%s3 + $0x118] sm:$0xf]
    %v741 = vld [vmem:[%s3 + $0x11c] sm:$0xf]
    %v742 = vld [vmem:[%s3 + $0x120] sm:$0xf]
    %v743 = vld [vmem:[%s3 + $0x124] sm:$0xf]
    %v744 = vld [vmem:[%s3 + $0x128] sm:$0xf]
    %v745 = vld [vmem:[%s3 + $0x12c] sm:$0xf]
    %v746 = vld [vmem:[%s3 + $0x130] sm:$0xf]
    %v747 = vld [vmem:[%s3 + $0x134] sm:$0xf]
    %v748 = vld [vmem:[%s3 + $0x138] sm:$0xf]
    %v749 = vld [vmem:[%s3 + $0x13c] sm:$0xf]
    %v750 = vld [vmem:[%s3 + $0x140] sm:$0xf]
    %v751 = vld [vmem:[%s3 + $0x144] sm:$0xf]
    %v752 = vld [vmem:[%s3 + $0x148] sm:$0xf]
    %v753 = vld [vmem:[%s3 + $0x14c] sm:$0xf]
    %v754 = vld [vmem:[%s3 + $0x150] sm:$0xf]
    %v755 = vld [vmem:[%s3 + $0x154] sm:$0xf]
    %v756 = vld [vmem:[%s3 + $0x158] sm:$0xf]
    %v757 = vld [vmem:[%s3 + $0x15c] sm:$0xf]
    %v758 = vld [vmem:[%s3 + $0x160] sm:$0xf]
    %v759 = vld [vmem:[%s3 + $0x164] sm:$0xf]
    %v760 = vld [vmem:[%s3 + $0x168] sm:$0xf]
    %v761 = vld [vmem:[%s3 + $0x16c] sm:$0xf]
    %v762 = vld [vmem:[%s3 + $0x170] sm:$0xf]
    %v763 = vld [vmem:[%s3 + $0x174] sm:$0xf]
    %v764 = vld [vmem:[%s3 + $0x178] sm:$0xf]
    %v765 = vld [vmem:[%s3 + $0x17c] sm:$0xf]
    %v766 = vld [vmem:[%s3 + $0x180] sm:$0xf]
    %v767 = vld [vmem:[%s3 + $0x184] sm:$0xf]
    %v768 = vld [vmem:[%s3 + $0x188] sm:$0xf]
    %v769 = vld [vmem:[%s3 + $0x18c] sm:$0xf]
    %v770 = vld [vmem:[%s3 + $0x190] sm:$0xf]
    %v771 = vld [vmem:[%s3 + $0x194] sm:$0xf]
    %v772 = vld [vmem:[%s3 + $0x198] sm:$0xf]
    %v773 = vld [vmem:[%s3 + $0x19c] sm:$0xf]
    %v774 = vld [vmem:[%s3 + $0x1a0] sm:$0xf]
    %v775 = vld [vmem:[%s3 + $0x1a4] sm:$0xf]
    %v776 = vld [vmem:[%s3 + $0x1a8] sm:$0xf]
    %v777 = vld [vmem:[%s3 + $0x1ac] sm:$0xf]
    %v778 = vld [vmem:[%s3 + $0x1b0] sm:$0xf]
    %v779 = vld [vmem:[%s3 + $0x1b4] sm:$0xf]
    %v780 = vld [vmem:[%s3 + $0x1b8] sm:$0xf]
    %v781 = vld [vmem:[%s3 + $0x1bc] sm:$0xf]
    %v782 = vld [vmem:[%s3 + $0x1c0] sm:$0xf]
    %v783 = vld [vmem:[%s3 + $0x1c4] sm:$0xf]
    %v784 = vld [vmem:[%s3 + $0x1c8] sm:$0xf]
    %v785 = vld [vmem:[%s3 + $0x1cc] sm:$0xf]
    %v786 = vld [vmem:[%s3 + $0x1d0] sm:$0xf]
    %v787 = vld [vmem:[%s3 + $0x1d4] sm:$0xf]
    %v788 = vld [vmem:[%s3 + $0x1d8] sm:$0xf]
    %v789 = vld [vmem:[%s3 + $0x1dc] sm:$0xf]
    %v790 = vld [vmem:[%s3 + $0x1e0] sm:$0xf]
    %v791 = vld [vmem:[%s3 + $0x1e4] sm:$0xf]
    %v792 = vld [vmem:[%s3 + $0x1e8] sm:$0xf]
    %v793 = vld [vmem:[%s3 + $0x1ec] sm:$0xf]
    %v794 = vld [vmem:[%s3 + $0x1f0] sm:$0xf]
    %v795 = vld [vmem:[%s3 + $0x1f4] sm:$0xf]
    %v796 = vld [vmem:[%s3 + $0x1f8] sm:$0xf]
    %v797 = vld [vmem:[%s3 + $0x1fc] sm:$0xf]
    %v926 = vunpack.c.l.b16 %v670
    %v927 = vunpack.c.l.b16 %v671
    %v928 = vunpack.c.l.b16 %v672
    %v929 = vunpack.c.l.b16 %v673
    %v930 = vunpack.c.l.b16 %v674
    %v931 = vunpack.c.l.b16 %v675
    %v932 = vunpack.c.l.b16 %v676
    %v933 = vunpack.c.l.b16 %v677
    %v934 = vunpack.c.l.b16 %v678
    %v935 = vunpack.c.l.b16 %v679
    %v936 = vunpack.c.l.b16 %v680
    %v937 = vunpack.c.l.b16 %v681
    %v938 = vunpack.c.l.b16 %v682
    %v939 = vunpack.c.l.b16 %v683
    %v940 = vunpack.c.l.b16 %v684
    %v941 = vunpack.c.l.b16 %v685
    %v942 = vunpack.c.l.b16 %v686
    %v943 = vunpack.c.l.b16 %v687
    %v944 = vunpack.c.l.b16 %v688
    %v945 = vunpack.c.l.b16 %v689
    %v946 = vunpack.c.l.b16 %v690
    %v947 = vunpack.c.l.b16 %v691
    %v948 = vunpack.c.l.b16 %v692
    %v949 = vunpack.c.l.b16 %v693
    %v950 = vunpack.c.l.b16 %v694
    %v951 = vunpack.c.l.b16 %v695
    %v952 = vunpack.c.l.b16 %v696
    %v953 = vunpack.c.l.b16 %v697
    %v954 = vunpack.c.l.b16 %v698
    %v955 = vunpack.c.l.b16 %v699
    %v956 = vunpack.c.l.b16 %v700
    %v957 = vunpack.c.l.b16 %v701
    %v958 = vunpack.c.l.b16 %v702
    %v959 = vunpack.c.l.b16 %v703
    %v960 = vunpack.c.l.b16 %v704
    %v961 = vunpack.c.l.b16 %v705
    %v962 = vunpack.c.l.b16 %v706
    %v963 = vunpack.c.l.b16 %v707
    %v964 = vunpack.c.l.b16 %v708
    %v965 = vunpack.c.l.b16 %v709
    %v966 = vunpack.c.l.b16 %v710
    %v967 = vunpack.c.l.b16 %v711
    %v968 = vunpack.c.l.b16 %v712
    %v969 = vunpack.c.l.b16 %v713
    %v970 = vunpack.c.l.b16 %v714
    %v971 = vunpack.c.l.b16 %v715
    %v972 = vunpack.c.l.b16 %v716
    %v973 = vunpack.c.l.b16 %v717
    %v974 = vunpack.c.l.b16 %v718
    %v975 = vunpack.c.l.b16 %v719
    %v976 = vunpack.c.l.b16 %v720
    %v977 = vunpack.c.l.b16 %v721
    %v978 = vunpack.c.l.b16 %v722
    %v979 = vunpack.c.l.b16 %v723
    %v980 = vunpack.c.l.b16 %v724
    %v981 = vunpack.c.l.b16 %v725
    %v982 = vunpack.c.l.b16 %v726
    %v983 = vunpack.c.l.b16 %v727
    %v984 = vunpack.c.l.b16 %v728
    %v985 = vunpack.c.l.b16 %v729
    %v986 = vunpack.c.l.b16 %v730
    %v987 = vunpack.c.l.b16 %v731
    %v988 = vunpack.c.l.b16 %v732
    %v989 = vunpack.c.l.b16 %v733
    %v990 = vunpack.c.l.b16 %v734
    %v991 = vunpack.c.l.b16 %v735
    %v992 = vunpack.c.l.b16 %v736
    %v993 = vunpack.c.l.b16 %v737
    %v994 = vunpack.c.l.b16 %v738
    %v995 = vunpack.c.l.b16 %v739
    %v996 = vunpack.c.l.b16 %v740
    %v997 = vunpack.c.l.b16 %v741
    %v998 = vunpack.c.l.b16 %v742
    %v999 = vunpack.c.l.b16 %v743
    %v1000 = vunpack.c.l.b16 %v744
    %v1001 = vunpack.c.l.b16 %v745
    %v1002 = vunpack.c.l.b16 %v746
    %v1003 = vunpack.c.l.b16 %v747
    %v1004 = vunpack.c.l.b16 %v748
    %v1005 = vunpack.c.l.b16 %v749
    %v1006 = vunpack.c.l.b16 %v750
    %v1007 = vunpack.c.l.b16 %v751
    %v1008 = vunpack.c.l.b16 %v752
    %v1009 = vunpack.c.l.b16 %v753
    %v1010 = vunpack.c.l.b16 %v754
    %v1011 = vunpack.c.l.b16 %v755
    %v1012 = vunpack.c.l.b16 %v756
    %v1013 = vunpack.c.l.b16 %v757
    %v1014 = vunpack.c.l.b16 %v758
    %v1015 = vunpack.c.l.b16 %v759
    %v1016 = vunpack.c.l.b16 %v760
    %v1017 = vunpack.c.l.b16 %v761
    %v1018 = vunpack.c.l.b16 %v762
    %v1019 = vunpack.c.l.b16 %v763
    %v1020 = vunpack.c.l.b16 %v764
    %v1021 = vunpack.c.l.b16 %v765
    %v1022 = vunpack.c.l.b16 %v766
    %v1023 = vunpack.c.l.b16 %v767
    %v1024 = vunpack.c.l.b16 %v768
    %v1025 = vunpack.c.l.b16 %v769
    %v1026 = vunpack.c.l.b16 %v770
    %v1027 = vunpack.c.l.b16 %v771
    %v1028 = vunpack.c.l.b16 %v772
    %v1029 = vunpack.c.l.b16 %v773
    %v1030 = vunpack.c.l.b16 %v774
    %v1031 = vunpack.c.l.b16 %v775
    %v1032 = vunpack.c.l.b16 %v776
    %v1033 = vunpack.c.l.b16 %v777
    %v1034 = vunpack.c.l.b16 %v778
    %v1035 = vunpack.c.l.b16 %v779
    %v1036 = vunpack.c.l.b16 %v780
    %v1037 = vunpack.c.l.b16 %v781
    %v1038 = vunpack.c.l.b16 %v782
    %v1039 = vunpack.c.l.b16 %v783
    %v1040 = vunpack.c.l.b16 %v784
    %v1041 = vunpack.c.l.b16 %v785
    %v1042 = vunpack.c.l.b16 %v786
    %v1043 = vunpack.c.l.b16 %v787
    %v1044 = vunpack.c.l.b16 %v788
    %v1045 = vunpack.c.l.b16 %v789
    %v1046 = vunpack.c.l.b16 %v790
    %v1047 = vunpack.c.l.b16 %v791
    %v1048 = vunpack.c.l.b16 %v792
    %v1049 = vunpack.c.l.b16 %v793
    %v1050 = vunpack.c.l.b16 %v794
    %v1051 = vunpack.c.l.b16 %v795
    %v1052 = vunpack.c.l.b16 %v796
    %v1053 = vunpack.c.l.b16 %v797
    %v1054 = vpack.c.b16 %v927, %v926
    %v1055 = vpack.c.b16 %v929, %v928
    %v1056 = vpack.c.b16 %v931, %v930
    %v1057 = vpack.c.b16 %v933, %v932
    %v1058 = vpack.c.b16 %v935, %v934
    %v1059 = vpack.c.b16 %v937, %v936
    %v1060 = vpack.c.b16 %v939, %v938
    %v1061 = vpack.c.b16 %v941, %v940
    %v1062 = vpack.c.b16 %v943, %v942
    %v1063 = vpack.c.b16 %v945, %v944
    %v1064 = vpack.c.b16 %v947, %v946
    %v1065 = vpack.c.b16 %v949, %v948
    %v1066 = vpack.c.b16 %v951, %v950
    %v1067 = vpack.c.b16 %v953, %v952
    %v1068 = vpack.c.b16 %v955, %v954
    %v1069 = vpack.c.b16 %v957, %v956
    %v1070 = vpack.c.b16 %v959, %v958
    %v1071 = vpack.c.b16 %v961, %v960
    %v1072 = vpack.c.b16 %v963, %v962
    %v1073 = vpack.c.b16 %v965, %v964
    %v1074 = vpack.c.b16 %v967, %v966
    %v1075 = vpack.c.b16 %v969, %v968
    %v1076 = vpack.c.b16 %v971, %v970
    %v1077 = vpack.c.b16 %v973, %v972
    %v1078 = vpack.c.b16 %v975, %v974
    %v1079 = vpack.c.b16 %v977, %v976
    %v1080 = vpack.c.b16 %v979, %v978
    %v1081 = vpack.c.b16 %v981, %v980
    %v1082 = vpack.c.b16 %v983, %v982
    %v1083 = vpack.c.b16 %v985, %v984
    %v1084 = vpack.c.b16 %v987, %v986
    %v1085 = vpack.c.b16 %v989, %v988
    %v1086 = vpack.c.b16 %v991, %v990
    %v1087 = vpack.c.b16 %v993, %v992
    %v1088 = vpack.c.b16 %v995, %v994
    %v1089 = vpack.c.b16 %v997, %v996
    %v1090 = vpack.c.b16 %v999, %v998
    %v1091 = vpack.c.b16 %v1001, %v1000
    %v1092 = vpack.c.b16 %v1003, %v1002
    %v1093 = vpack.c.b16 %v1005, %v1004
    %v1094 = vpack.c.b16 %v1007, %v1006
    %v1095 = vpack.c.b16 %v1009, %v1008
    %v1096 = vpack.c.b16 %v1011, %v1010
    %v1097 = vpack.c.b16 %v1013, %v1012
    %v1098 = vpack.c.b16 %v1015, %v1014
    %v1099 = vpack.c.b16 %v1017, %v1016
    %v1100 = vpack.c.b16 %v1019, %v1018
    %v1101 = vpack.c.b16 %v1021, %v1020
    %v1102 = vpack.c.b16 %v1023, %v1022
    %v1103 = vpack.c.b16 %v1025, %v1024
    %v1104 = vpack.c.b16 %v1027, %v1026
    %v1105 = vpack.c.b16 %v1029, %v1028
    %v1106 = vpack.c.b16 %v1031, %v1030
    %v1107 = vpack.c.b16 %v1033, %v1032
    %v1108 = vpack.c.b16 %v1035, %v1034
    %v1109 = vpack.c.b16 %v1037, %v1036
    %v1110 = vpack.c.b16 %v1039, %v1038
    %v1111 = vpack.c.b16 %v1041, %v1040
    %v1112 = vpack.c.b16 %v1043, %v1042
    %v1113 = vpack.c.b16 %v1045, %v1044
    %v1114 = vpack.c.b16 %v1047, %v1046
    %v1115 = vpack.c.b16 %v1049, %v1048
    %v1116 = vpack.c.b16 %v1051, %v1050
    %v1117 = vpack.c.b16 %v1053, %v1052
    %1182 = vmatprep.subr.bf16.mxu0 0
    %1183 = vmatpush1.bf16.msra.mxu0 %v1061
    %1184 = vmatprep.subr.bf16.mxu0 0
    %1185 = vmatpush1.bf16.msra.mxu0 %v1060
    %1186 = vmatprep.subr.bf16.mxu0 0
    %1187 = vmatpush1.bf16.msra.mxu0 %v1059
    %1188 = vmatprep.subr.bf16.mxu0 0
    %1189 = vmatpush1.bf16.msra.mxu0 %v1058
    %1190 = vmatprep.subr.bf16.mxu0 0
    %1191 = vmatpush1.bf16.msra.mxu0 %v1057
    %1192 = vmatprep.subr.bf16.mxu0 0
    %1193 = vmatpush1.bf16.msra.mxu0 %v1056
    %1194 = vmatprep.subr.bf16.mxu0 0
    %1195 = vmatpush1.bf16.msra.mxu0 %v1055
    %1196 = vmatprep.subr.bf16.mxu0 0
    %1197 = vmatpush1.bf16.msra.mxu0 %v1054
    %1198 = vmatprep.subr.bf16.mxu0 0
    %1199 = vmatpush2.bf16.msra.mxu0 %v1069
    %1200 = vmatprep.subr.bf16.mxu0 0
    %1201 = vmatpush2.bf16.msra.mxu0 %v1068
    %1202 = vmatprep.subr.bf16.mxu0 0
    %1203 = vmatpush2.bf16.msra.mxu0 %v1067
    %1204 = vmatprep.subr.bf16.mxu0 0
    %1205 = vmatpush2.bf16.msra.mxu0 %v1066
    %1206 = vmatprep.subr.bf16.mxu0 0
    %1207 = vmatpush2.bf16.msra.mxu0 %v1065
    %1208 = vmatprep.subr.bf16.mxu0 0
    %1209 = vmatpush2.bf16.msra.mxu0 %v1064
    %1210 = vmatprep.subr.bf16.mxu0 0
    %1211 = vmatpush2.bf16.msra.mxu0 %v1063
    %1212 = vmatprep.subr.bf16.mxu0 0
    %1213 = vmatpush2.bf16.msra.mxu0 %v1062
    %1214 = vmatprep.mubr.bf16.mxu0 %v639
    %1215 = vmatmul.mubr.bf16.gmra.mxu0 %v638
    %v1216 = vpop.f32.mrf.mxu0
    %v1217 = vadd.f32 0.0, %v1216
    %v1218 = vpop.f32.mrf.mxu0
    %v1219 = vpop.f32.mrf.mxu0
    %v1220 = vadd.f32 0.0, %v1219
    %v1221 = vpop.f32.mrf.mxu0
    %1222 = vmatprep.mubr.bf16.mxu0 %v647
    %1223 = vmatmul.mubr.bf16.gmra.mxu0 %v646
    %v1224 = vpop.f32.mrf.mxu0
    %v1225 = vadd.f32 0.0, %v1224
    %v1226 = vpop.f32.mrf.mxu0
    %v1227 = vpop.f32.mrf.mxu0
    %v1228 = vadd.f32 0.0, %v1227
    %v1229 = vpop.f32.mrf.mxu0
    %1230 = vmatprep.mubr.bf16.mxu0 %v655
    %1231 = vmatmul.mubr.bf16.gmra.mxu0 %v654
    %v1232 = vpop.f32.mrf.mxu0
    %v1233 = vadd.f32 0.0, %v1232
    %v1234 = vpop.f32.mrf.mxu0
    %v1235 = vpop.f32.mrf.mxu0
    %v1236 = vadd.f32 0.0, %v1235
    %v1237 = vpop.f32.mrf.mxu0
    %1238 = vmatprep.mubr.bf16.mxu0 %v663
    %1239 = vmatmul.mubr.bf16.gmra.mxu0 %v662
    %v1240 = vpop.f32.mrf.mxu0
    %v1241 = vadd.f32 0.0, %v1240
    %v1242 = vpop.f32.mrf.mxu0
    %v1243 = vpop.f32.mrf.mxu0
    %v1244 = vadd.f32 0.0, %v1243
    %v1245 = vpop.f32.mrf.mxu0
    %1246 = vdwg.mxu0
    %1247 = vmatprep.subr.bf16.mxu0 0
    %1248 = vmatpush1.bf16.msra.mxu0 %v1077
    %1249 = vmatprep.subr.bf16.mxu0 0
    %1250 = vmatpush1.bf16.msra.mxu0 %v1076
    %1251 = vmatprep.subr.bf16.mxu0 0
    %1252 = vmatpush1.bf16.msra.mxu0 %v1075
    %1253 = vmatprep.subr.bf16.mxu0 0
    %1254 = vmatpush1.bf16.msra.mxu0 %v1074
    %1255 = vmatprep.subr.bf16.mxu0 0
    %1256 = vmatpush1.bf16.msra.mxu0 %v1073
    %1257 = vmatprep.subr.bf16.mxu0 0
    %1258 = vmatpush1.bf16.msra.mxu0 %v1072
    %1259 = vmatprep.subr.bf16.mxu0 0
    %1260 = vmatpush1.bf16.msra.mxu0 %v1071
    %1261 = vmatprep.subr.bf16.mxu0 0
    %1262 = vmatpush1.bf16.msra.mxu0 %v1070
    %1263 = vmatprep.subr.bf16.mxu0 0
    %1264 = vmatpush2.bf16.msra.mxu0 %v1085
    %1265 = vmatprep.subr.bf16.mxu0 0
    %1266 = vmatpush2.bf16.msra.mxu0 %v1084
    %1267 = vmatprep.subr.bf16.mxu0 0
    %1268 = vmatpush2.bf16.msra.mxu0 %v1083
    %1269 = vmatprep.subr.bf16.mxu0 0
    %1270 = vmatpush2.bf16.msra.mxu0 %v1082
    %1271 = vmatprep.subr.bf16.mxu0 0
    %1272 = vmatpush2.bf16.msra.mxu0 %v1081
    %1273 = vmatprep.subr.bf16.mxu0 0
    %1274 = vmatpush2.bf16.msra.mxu0 %v1080
    %1275 = vmatprep.subr.bf16.mxu0 0
    %1276 = vmatpush2.bf16.msra.mxu0 %v1079
    %1277 = vmatprep.subr.bf16.mxu0 0
    %1278 = vmatpush2.bf16.msra.mxu0 %v1078
    %1279 = vmatprep.mubr.bf16.mxu0 %v641
    %1280 = vmatmul.mubr.bf16.gmra.mxu0 %v640
    %v1281 = vpop.f32.mrf.mxu0
    %v1282 = vadd.f32 %v1217, %v1281
    %v1283 = vpop.f32.mrf.mxu0
    %v1284 = vpop.f32.mrf.mxu0
    %v1285 = vadd.f32 %v1220, %v1284
    %v1286 = vpop.f32.mrf.mxu0
    %1287 = vmatprep.mubr.bf16.mxu0 %v649
    %1288 = vmatmul.mubr.bf16.gmra.mxu0 %v648
    %v1289 = vpop.f32.mrf.mxu0
    %v1290 = vadd.f32 %v1225, %v1289
    %v1291 = vpop.f32.mrf.mxu0
    %v1292 = vpop.f32.mrf.mxu0
    %v1293 = vadd.f32 %v1228, %v1292
    %v1294 = vpop.f32.mrf.mxu0
    %1295 = vmatprep.mubr.bf16.mxu0 %v657
    %1296 = vmatmul.mubr.bf16.gmra.mxu0 %v656
    %v1297 = vpop.f32.mrf.mxu0
    %v1298 = vadd.f32 %v1233, %v1297
    %v1299 = vpop.f32.mrf.mxu0
    %v1300 = vpop.f32.mrf.mxu0
    %v1301 = vadd.f32 %v1236, %v1300
    %v1302 = vpop.f32.mrf.mxu0
    %1303 = vmatprep.mubr.bf16.mxu0 %v665
    %1304 = vmatmul.mubr.bf16.gmra.mxu0 %v664
    %v1305 = vpop.f32.mrf.mxu0
    %v1306 = vadd.f32 %v1241, %v1305
    %v1307 = vpop.f32.mrf.mxu0
    %v1308 = vpop.f32.mrf.mxu0
    %v1309 = vadd.f32 %v1244, %v1308
    %v1310 = vpop.f32.mrf.mxu0
    %1311 = vdwg.mxu0
    %1312 = vmatprep.subr.bf16.mxu0 0
    %1313 = vmatpush1.bf16.msra.mxu0 %v1093
    %1314 = vmatprep.subr.bf16.mxu0 0
    %1315 = vmatpush1.bf16.msra.mxu0 %v1092
    %1316 = vmatprep.subr.bf16.mxu0 0
    %1317 = vmatpush1.bf16.msra.mxu0 %v1091
    %1318 = vmatprep.subr.bf16.mxu0 0
    %1319 = vmatpush1.bf16.msra.mxu0 %v1090
    %1320 = vmatprep.subr.bf16.mxu0 0
    %1321 = vmatpush1.bf16.msra.mxu0 %v1089
    %1322 = vmatprep.subr.bf16.mxu0 0
    %1323 = vmatpush1.bf16.msra.mxu0 %v1088
    %1324 = vmatprep.subr.bf16.mxu0 0
    %1325 = vmatpush1.bf16.msra.mxu0 %v1087
    %1326 = vmatprep.subr.bf16.mxu0 0
    %1327 = vmatpush1.bf16.msra.mxu0 %v1086
    %1328 = vmatprep.subr.bf16.mxu0 0
    %1329 = vmatpush2.bf16.msra.mxu0 %v1101
    %1330 = vmatprep.subr.bf16.mxu0 0
    %1331 = vmatpush2.bf16.msra.mxu0 %v1100
    %1332 = vmatprep.subr.bf16.mxu0 0
    %1333 = vmatpush2.bf16.msra.mxu0 %v1099
    %1334 = vmatprep.subr.bf16.mxu0 0
    %1335 = vmatpush2.bf16.msra.mxu0 %v1098
    %1336 = vmatprep.subr.bf16.mxu0 0
    %1337 = vmatpush2.bf16.msra.mxu0 %v1097
    %1338 = vmatprep.subr.bf16.mxu0 0
    %1339 = vmatpush2.bf16.msra.mxu0 %v1096
    %1340 = vmatprep.subr.bf16.mxu0 0
    %1341 = vmatpush2.bf16.msra.mxu0 %v1095
    %1342 = vmatprep.subr.bf16.mxu0 0
    %1343 = vmatpush2.bf16.msra.mxu0 %v1094
    %1344 = vmatprep.mubr.bf16.mxu0 %v643
    %1345 = vmatmul.mubr.bf16.gmra.mxu0 %v642
    %v1346 = vpop.f32.mrf.mxu0
    %v1347 = vadd.f32 %v1282, %v1346
    %v1348 = vpop.f32.mrf.mxu0
    %v1349 = vpop.f32.mrf.mxu0
    %v1350 = vadd.f32 %v1285, %v1349
    %v1351 = vpop.f32.mrf.mxu0
    %1352 = vmatprep.mubr.bf16.mxu0 %v651
    %1353 = vmatmul.mubr.bf16.gmra.mxu0 %v650
    %v1354 = vpop.f32.mrf.mxu0
    %v1355 = vadd.f32 %v1290, %v1354
    %v1356 = vpop.f32.mrf.mxu0
    %v1357 = vpop.f32.mrf.mxu0
    %v1358 = vadd.f32 %v1293, %v1357
    %v1359 = vpop.f32.mrf.mxu0
    %1360 = vmatprep.mubr.bf16.mxu0 %v659
    %1361 = vmatmul.mubr.bf16.gmra.mxu0 %v658
    %v1362 = vpop.f32.mrf.mxu0
    %v1363 = vadd.f32 %v1298, %v1362
    %v1364 = vpop.f32.mrf.mxu0
    %v1365 = vpop.f32.mrf.mxu0
    %v1366 = vadd.f32 %v1301, %v1365
    %v1367 = vpop.f32.mrf.mxu0
    %1368 = vmatprep.mubr.bf16.mxu0 %v667
    %1369 = vmatmul.mubr.bf16.gmra.mxu0 %v666
    %v1370 = vpop.f32.mrf.mxu0
    %v1371 = vadd.f32 %v1306, %v1370
    %v1372 = vpop.f32.mrf.mxu0
    %v1373 = vpop.f32.mrf.mxu0
    %v1374 = vadd.f32 %v1309, %v1373
    %v1375 = vpop.f32.mrf.mxu0
    %1376 = vdwg.mxu0
    %1377 = vmatprep.subr.bf16.mxu0 0
    %1378 = vmatpush1.bf16.msra.mxu0 %v1109
    %1379 = vmatprep.subr.bf16.mxu0 0
    %1380 = vmatpush1.bf16.msra.mxu0 %v1108
    %1381 = vmatprep.subr.bf16.mxu0 0
    %1382 = vmatpush1.bf16.msra.mxu0 %v1107
    %1383 = vmatprep.subr.bf16.mxu0 0
    %1384 = vmatpush1.bf16.msra.mxu0 %v1106
    %1385 = vmatprep.subr.bf16.mxu0 0
    %1386 = vmatpush1.bf16.msra.mxu0 %v1105
    %1387 = vmatprep.subr.bf16.mxu0 0
    %1388 = vmatpush1.bf16.msra.mxu0 %v1104
    %1389 = vmatprep.subr.bf16.mxu0 0
    %1390 = vmatpush1.bf16.msra.mxu0 %v1103
    %1391 = vmatprep.subr.bf16.mxu0 0
    %1392 = vmatpush1.bf16.msra.mxu0 %v1102
    %1393 = vmatprep.subr.bf16.mxu0 0
    %1394 = vmatpush2.bf16.msra.mxu0 %v1117
    %1395 = vmatprep.subr.bf16.mxu0 0
    %1396 = vmatpush2.bf16.msra.mxu0 %v1116
    %1397 = vmatprep.subr.bf16.mxu0 0
    %1398 = vmatpush2.bf16.msra.mxu0 %v1115
    %1399 = vmatprep.subr.bf16.mxu0 0
    %1400 = vmatpush2.bf16.msra.mxu0 %v1114
    %1401 = vmatprep.subr.bf16.mxu0 0
    %1402 = vmatpush2.bf16.msra.mxu0 %v1113
    %1403 = vmatprep.subr.bf16.mxu0 0
    %1404 = vmatpush2.bf16.msra.mxu0 %v1112
    %1405 = vmatprep.subr.bf16.mxu0 0
    %1406 = vmatpush2.bf16.msra.mxu0 %v1111
    %1407 = vmatprep.subr.bf16.mxu0 0
    %1408 = vmatpush2.bf16.msra.mxu0 %v1110
    %1409 = vmatprep.mubr.bf16.mxu0 %v645
    %1410 = vmatmul.mubr.bf16.gmra.mxu0 %v644
    %v1411 = vpop.f32.mrf.mxu0
    %v1412 = vadd.f32 %v1347, %v1411
    %v1413 = vpop.f32.mrf.mxu0
    %v1414 = vpop.f32.mrf.mxu0
    %v1415 = vadd.f32 %v1350, %v1414
    %v1416 = vpop.f32.mrf.mxu0
    %1417 = vmatprep.mubr.bf16.mxu0 %v653
    %1418 = vmatmul.mubr.bf16.gmra.mxu0 %v652
    %v1419 = vpop.f32.mrf.mxu0
    %v1420 = vadd.f32 %v1355, %v1419
    %v1421 = vpop.f32.mrf.mxu0
    %v1422 = vpop.f32.mrf.mxu0
    %v1423 = vadd.f32 %v1358, %v1422
    %v1424 = vpop.f32.mrf.mxu0
    %1425 = vmatprep.mubr.bf16.mxu0 %v661
    %1426 = vmatmul.mubr.bf16.gmra.mxu0 %v660
    %v1427 = vpop.f32.mrf.mxu0
    %v1428 = vadd.f32 %v1363, %v1427
    %v1429 = vpop.f32.mrf.mxu0
    %v1430 = vpop.f32.mrf.mxu0
    %v1431 = vadd.f32 %v1366, %v1430
    %v1432 = vpop.f32.mrf.mxu0
    %1433 = vmatprep.mubr.bf16.mxu0 %v669
    %1434 = vmatmul.mubr.bf16.gmra.mxu0 %v668
    %v1435 = vpop.f32.mrf.mxu0
    %v1436 = vadd.f32 %v1371, %v1435
    %v1437 = vpop.f32.mrf.mxu0
    %v1438 = vpop.f32.mrf.mxu0
    %v1439 = vadd.f32 %v1374, %v1438
    %v1440 = vpop.f32.mrf.mxu0
    %1441 = vdwg.mxu0
    %v1442 = vld [vmem:[%s4] sm:$0xf]
    %v1443 = vld [vmem:[%s4 + $0x4] sm:$0xf]
    %v1444 = vld [vmem:[%s4 + $0x8] sm:$0xf]
    %v1445 = vld [vmem:[%s4 + $0xc] sm:$0xf]
    %v1446 = vpack.c.bf16 %v1415, %v1412
    %v1447 = vpack.c.bf16 %v1423, %v1420
    %v1448 = vpack.c.bf16 %v1431, %v1428
    %v1449 = vpack.c.bf16 %v1439, %v1436
    %v1450 = vld [vmem:[%s5] sm:$0xff]
    %v1451 = vld [vmem:[%s5 + $0x8] sm:$0xff]
    %v1452 = vld [vmem:[%s5 + $0x10] sm:$0xff]
    %v1453 = vld [vmem:[%s5 + $0x18] sm:$0xff]
    %1455 = vset.pattern.permute.xlu0 0
    %1456 = vperm.xlu0 %1455, %v1450
    %v1457 = vpop.permute.xlu0 %1456
    %1460 = vset.pattern.permute.xlu0 0
    %1461 = vperm.xlu0 %1460, %v1451
    %v1462 = vpop.permute.xlu0 %1461
    %1465 = vset.pattern.permute.xlu0 0
    %1466 = vperm.xlu0 %1465, %v1452
    %v1467 = vpop.permute.xlu0 %1466
    %1470 = vset.pattern.permute.xlu0 0
    %1471 = vperm.xlu0 %1470, %v1453
    %v1472 = vpop.permute.xlu0 %1471
    %v1478 = vunpack.c.l.b16 %v1442
    %v1479 = vunpack.c.l.b16 %v1443
    %v1480 = vunpack.c.l.b16 %v1444
    %v1481 = vunpack.c.l.b16 %v1445
    %v1482 = vpack.c.b16 %v1479, %v1478
    %v1483 = vpack.c.b16 %v1481, %v1480
    %vm1484 = vcmask 523264
    %v1486 = vsel %vm1484, %v1482, 0
    %v1489 = vsel %vm1484, %v1483, 0
    %1491 = vmatprep.subr.bf16.mxu0 0
    %1492 = vmatpush1.bf16.msra.mxu0 0
    %1493 = vmatprep.subr.bf16.mxu0 0
    %1494 = vmatpush1.bf16.msra.mxu0 0
    %1495 = vmatprep.subr.bf16.mxu0 0
    %1496 = vmatpush1.bf16.msra.mxu0 0
    %1497 = vmatprep.subr.bf16.mxu0 0
    %1498 = vmatpush1.bf16.msra.mxu0 0
    %1499 = vmatprep.subr.bf16.mxu0 0
    %1500 = vmatpush1.bf16.msra.mxu0 %v1449
    %1501 = vmatprep.subr.bf16.mxu0 0
    %1502 = vmatpush1.bf16.msra.mxu0 %v1448
    %1503 = vmatprep.subr.bf16.mxu0 0
    %1504 = vmatpush1.bf16.msra.mxu0 %v1447
    %1505 = vmatprep.subr.bf16.mxu0 0
    %1506 = vmatpush1.bf16.msra.mxu0 %v1446
    %1507 = vmatprep.subr.bf16.mxu0 0
    %1508 = vmatpush2.bf16.msra.mxu0 0
    %1509 = vmatprep.subr.bf16.mxu0 0
    %1510 = vmatpush2.bf16.msra.mxu0 0
    %1511 = vmatprep.subr.bf16.mxu0 0
    %1512 = vmatpush2.bf16.msra.mxu0 0
    %1513 = vmatprep.subr.bf16.mxu0 0
    %1514 = vmatpush2.bf16.msra.mxu0 0
    %1515 = vmatprep.subr.bf16.mxu0 0
    %1516 = vmatpush2.bf16.msra.mxu0 0
    %1517 = vmatprep.subr.bf16.mxu0 0
    %1518 = vmatpush2.bf16.msra.mxu0 0
    %1519 = vmatprep.subr.bf16.mxu0 0
    %1520 = vmatpush2.bf16.msra.mxu0 0
    %1521 = vmatprep.subr.bf16.mxu0 0
    %1522 = vmatpush2.bf16.msra.mxu0 0
    %1523 = vmatprep.mubr.bf16.mxu0 0
    %1524 = vmatmul.mubr.bf16.gmra.mxu0 %v1486
    %v1525 = vpop.f32.mrf.mxu0
    %v1526 = vadd.f32 %v1457, %v1525
    %v1527 = vpop.f32.mrf.mxu0
    %v1528 = vpop.f32.mrf.mxu0
    %v1529 = vadd.f32 %v1462, %v1528
    %v1530 = vpop.f32.mrf.mxu0
    %1531 = vmatprep.mubr.bf16.mxu0 0
    %1532 = vmatmul.mubr.bf16.gmra.mxu0 %v1489
    %v1533 = vpop.f32.mrf.mxu0
    %v1534 = vadd.f32 %v1467, %v1533
    %v1535 = vpop.f32.mrf.mxu0
    %v1536 = vpop.f32.mrf.mxu0
    %v1537 = vadd.f32 %v1472, %v1536
    %v1538 = vpop.f32.mrf.mxu0
    %1539 = vdwg.mxu0
    %v1540 = vmul.f32 %v1526, %v1526
    %v1541 = vmul.f32 %v1529, %v1529
    %v1542 = vmul.f32 %v1534, %v1534
    %v1543 = vmul.f32 %v1537, %v1537
    %v1544 = vadd.f32 %v1540, %v1541
    %v1545 = vadd.f32 %v1544, %v1542
    %v1546 = vadd.f32 %v1545, %v1543
    %v1547 = vrot.slane %v1546, 4
    %v1548 = vadd.f32 %v1546, %v1547
    %v1549 = vrot.slane %v1548, 2
    %v1550 = vadd.f32 %v1548, %v1549
    %v1551 = vrot.slane %v1550, 1
    %v1552 = vadd.f32 %v1550, %v1551
    %v1553 = vmax.f32 %v1552, 1e-24
    %v1554 = vrsqrt.pop %v1553
    %v1555 = vmul.f32 %v1526, %v1554
    %v1556 = vmul.f32 %v1529, %v1554
    %v1557 = vmul.f32 %v1534, %v1554
    %v1558 = vmul.f32 %v1537, %v1554
    %v1559 = vld [vmem:[%s6] sm:$0xf]
    %v1560 = vld [vmem:[%s6 + $0x4] sm:$0xf]
    %v1561 = vpack.c.bf16 %v1556, %v1555
    %v1562 = vpack.c.bf16 %v1558, %v1557
    %v1565 = vunpack.c.l.b16 %v1559
    %v1566 = vunpack.c.l.b16 %v1560
    %v1567 = vpack.c.b16 %v1566, %v1565
    %vm1568 = vcmask 261120
    %v1570 = vsel %vm1568, %v1567, 0
    %1572 = vmatprep.subr.bf16.mxu0 0
    %1573 = vmatpush1.bf16.msra.mxu0 0
    %1574 = vmatprep.subr.bf16.mxu0 0
    %1575 = vmatpush1.bf16.msra.mxu0 0
    %1576 = vmatprep.subr.bf16.mxu0 0
    %1577 = vmatpush1.bf16.msra.mxu0 0
    %1578 = vmatprep.subr.bf16.mxu0 0
    %1579 = vmatpush1.bf16.msra.mxu0 0
    %1580 = vmatprep.subr.bf16.mxu0 0
    %1581 = vmatpush1.bf16.msra.mxu0 0
    %1582 = vmatprep.subr.bf16.mxu0 0
    %1583 = vmatpush1.bf16.msra.mxu0 0
    %1584 = vmatprep.subr.bf16.mxu0 0
    %1585 = vmatpush1.bf16.msra.mxu0 %v1562
    %1586 = vmatprep.subr.bf16.mxu0 0
    %1587 = vmatpush1.bf16.msra.mxu0 %v1561
    %1588 = vmatprep.subr.bf16.mxu0 0
    %1589 = vmatpush2.bf16.msra.mxu0 0
    %1590 = vmatprep.subr.bf16.mxu0 0
    %1591 = vmatpush2.bf16.msra.mxu0 0
    %1592 = vmatprep.subr.bf16.mxu0 0
    %1593 = vmatpush2.bf16.msra.mxu0 0
    %1594 = vmatprep.subr.bf16.mxu0 0
    %1595 = vmatpush2.bf16.msra.mxu0 0
    %1596 = vmatprep.subr.bf16.mxu0 0
    %1597 = vmatpush2.bf16.msra.mxu0 0
    %1598 = vmatprep.subr.bf16.mxu0 0
    %1599 = vmatpush2.bf16.msra.mxu0 0
    %1600 = vmatprep.subr.bf16.mxu0 0
    %1601 = vmatpush2.bf16.msra.mxu0 0
    %1602 = vmatprep.subr.bf16.mxu0 0
    %1603 = vmatpush2.bf16.msra.mxu0 0
    %1604 = vmatprep.mubr.bf16.mxu0 0
    %1605 = vmatmul.mubr.bf16.gmra.mxu0 %v1570
    %v1606 = vpop.f32.mrf.mxu0
    %v1607 = vadd.f32 0.0, %v1606
    %v1608 = vpop.f32.mrf.mxu0
    %v1609 = vpop.f32.mrf.mxu0
    %v1610 = vadd.f32 0.0, %v1609
    %v1611 = vpop.f32.mrf.mxu0
    %1612 = vdwg.mxu0
    %v1613 = vmul.f32 %v1607, %v1607
    %v1614 = vmul.f32 %v1610, %v1610
    %v1615 = vsub.f32 1.0, %v1613
    %v1616 = vsub.f32 1.0, %v1614
    %v1617 = vmax.f32 %v1615, 0.0
    %v1618 = vmax.f32 %v1616, 0.0
    %v1619 = vmin.f32 %v1617, 1.0
    %v1620 = vmin.f32 %v1618, 1.0
    %v1621 = vrsqrt.pop %v1619
    %v1622 = vmul.f32 %v1619, %v1621
    %vm1623 = vcmp.eq.f32.partialorder %v1619, inf
    %v1624 = vsel %vm1623, %v1619, %v1622
    %vm1625 = vcmp.eq.f32.partialorder %v1619, 0.0
    %v1626 = vand.u32 %v1619, 2147483648
    %v1627 = vsel %vm1625, %v1626, %v1624
    %v1628 = vrsqrt.pop %v1620
    %v1629 = vmul.f32 %v1620, %v1628
    %vm1630 = vcmp.eq.f32.partialorder %v1620, inf
    %v1631 = vsel %vm1630, %v1620, %v1629
    %vm1632 = vcmp.eq.f32.partialorder %v1620, 0.0
    %v1633 = vand.u32 %v1620, 2147483648
    %v1634 = vsel %vm1632, %v1633, %v1631
    %v1635 = vmul.f32 %v1607, 0.87758255
    %v1636 = vmul.f32 %v1610, 0.87758255
    %v1637 = vmul.f32 %v1627, 0.47942555
    %v1638 = vmul.f32 %v1634, 0.47942555
    %v1639 = vsub.f32 %v1635, %v1637
    %v1640 = vsub.f32 %v1636, %v1638
    %vm1641 = vcmp.gt.f32.partialorder %v1607, -0.87758255
    %vm1642 = vcmp.gt.f32.partialorder %v1610, -0.87758255
    %v1643 = vsub.f32 %v1607, 0.23971277
    %v1644 = vsub.f32 %v1610, 0.23971277
    %v1645 = vsel %vm1641, %v1639, %v1643
    %v1646 = vsel %vm1642, %v1640, %v1644
    %v1647 = vld [vmem:[%s7] sm:$0x1]
    %v1648 = vlaneseq
    %v1649 = vshrl.u32 %v1648, 7
    %v1650 = vadd.s32 %v1649, 8
    %v1651 = vlaneseq
    %v1652 = vshrl.u32 %v1651, 7
    %v1653 = vsub.s32 0, %v1652
    %v1654 = vrot.slane %v1647, %v1653
    %vm1655 = vcmp.eq.s32.totalorder %v1649, %v1654
    %vm1656 = vcmp.eq.s32.totalorder %v1650, %v1654
    %v1657 = vsel %vm1655, 1, 0
    %v1658 = vsel %vm1656, 1, 0
    %v1659 = vcvt.s32.f32 %v1657
    %v1660 = vcvt.s32.f32 %v1658
    %v1661 = vmul.f32 %v1659, %v1645
    %v1662 = vmul.f32 %v1660, %v1646
    %v1663 = vsub.f32 1.0, %v1659
    %v1664 = vsub.f32 1.0, %v1660
    %v1665 = vmul.f32 %v1663, %v1607
    %v1666 = vmul.f32 %v1664, %v1610
    %v1667 = vadd.f32 %v1661, %v1665
    %v1668 = vadd.f32 %v1662, %v1666
    %v1669 = vmul.f32 %v1667, 30.0
    %v1670 = vmul.f32 %v1668, 30.0
    %1671 = vst [vmem:[%s8] sm:$0xff] %v1669
    %1672 = vst [vmem:[%s8 + $0x8] sm:$0xff] %v1670
    %v1673 = vmax.f32 %v1669, %v1670
    %v1674 = vrot.slane %v1673, 4
    %v1675 = vmax.f32 %v1673, %v1674
    %v1676 = vrot.slane %v1675, 2
    %v1677 = vmax.f32 %v1675, %v1676
    %v1678 = vrot.slane %v1677, 1
    %v1679 = vmax.f32 %v1677, %v1678
    %v1680 = vsub.f32 %v1669, %v1679
    %v1681 = vsub.f32 %v1670, %v1679
    %v1682 = vmul.f32 %v1680, 1.442695
    %v1683 = vpow.pop %v1682
    %v1684 = vmul.f32 %v1681, 1.442695
    %v1685 = vpow.pop %v1684
    %v1686 = vadd.f32 %v1683, %v1685
    %v1687 = vrot.slane %v1686, 4
    %v1688 = vadd.f32 %v1686, %v1687
    %v1689 = vrot.slane %v1688, 2
    %v1690 = vadd.f32 %v1688, %v1689
    %v1691 = vrot.slane %v1690, 1
    %v1692 = vadd.f32 %v1690, %v1691
    %v1693 = vlog2.pop %v1692
    %v1694 = vmul.f32 %v1693, 0.6931472
    %v1695 = vadd.f32 %v1694, %v1679
    %v1696 = vmul.f32 %v1659, %v1669
    %v1697 = vmul.f32 %v1660, %v1670
    %v1698 = vadd.f32 %v1696, %v1697
    %v1699 = vrot.slane %v1698, 4
    %v1700 = vadd.f32 %v1698, %v1699
    %v1701 = vrot.slane %v1700, 2
    %v1702 = vadd.f32 %v1700, %v1701
    %v1703 = vrot.slane %v1702, 1
    %v1704 = vadd.f32 %v1702, %v1703
    %v1705 = vlaneseq
    %v1706 = vand.u32 %v1705, 127
    %vm1707 = vcmp.lt.s32.totalorder %v1706, 4
    %v1708 = vsel %vm1707, 1, 0
    %v1709 = vcvt.s32.f32 %v1708
    %v1710 = vsub.f32 %v1695, %v1704
    %v1711 = vmul.f32 %v1710, %v1709
    %vm1712 = vcmask 1040384
    %v1713 = vsel %vm1712, %v1711, 0.0
    %1714 = vadd.xlane.f32.xlu0 %v1713
    %v1715 = vpop.xlane.xlu0 %1714
    %v1716 = vrot.slane %v1715, 4
    %v1717 = vadd.f32 %v1715, %v1716
    %v1718 = vrot.slane %v1717, 2
    %v1719 = vadd.f32 %v1717, %v1718
    %v1720 = vrot.slane %v1719, 1
    %v1721 = vadd.f32 %v1719, %v1720
    %s1722 = vtos %v1721
    %s1723 = smul.f32 %s1722, 0.25
    %s1724 = scalar_lea.smem [#allocation2], 0
    %1725 = sst [smem:[%s1724]] %s1723
    // Predicated region
    $region34: #{shopee_forward.1} parent=1 // pred_check
      _
    $region35: #{shopee_forward.1} parent=1 // pred_check_branch
      %1727 = sbr.rel (0) target = $region37
    $region36: #{shopee_forward.1} parent=1 // pred_region
      _
    $region37: #{shopee_forward.1} parent=1 // pred_fallthru
      _
    // Predicated region
    $region38: #{shopee_forward.1} parent=1 // pred_check
      _
    $region39: #{shopee_forward.1} parent=1 // pred_check_branch
      %1729 = sbr.rel (0) target = $region41
    $region40: #{shopee_forward.1} parent=1 // pred_region
      %s1731 = ssub.s32 16, 16
      %1732 = vsyncadd [#allocation3], %s1731
      %1735 = dma.smem_to_hbm [#allocation2], 16, %s9, [#allocation3]
    $region41: #{shopee_forward.1} parent=1 // pred_fallthru
      _
    // Predicated region
    $region42: #{shopee_forward.1} parent=1 // pred_check
      _
    $region43: #{shopee_forward.1} parent=1 // pred_check_branch
      %1737 = sbr.rel (0) target = $region45
    $region44: #{shopee_forward.1} parent=1 // pred_region
      _
    $region45: #{shopee_forward.1} parent=1 // pred_fallthru
      _
    // Predicated region
    $region46: #{shopee_forward.1} parent=1 // pred_check
      _
    $region47: #{shopee_forward.1} parent=1 // pred_check_branch
      %1739 = sbr.rel (0) target = $region49
    $region48: #{shopee_forward.1} parent=1 // pred_region
      %1740 = dma.done [#allocation3], 16
    $region49: #{shopee_forward.1} parent=1 // pred_fallthru
      _
    %1741 = sfence
    %1742 = vsyncpa [#allocation3], 1

</llo_original>
